<compile_context>
chip_gen: v7x
topology: tpu7x:2x2x1
jax: 0.10.0
libtpu: 0.0.40
codegen_flags: <defaults>
</compile_context>

<pallas_src>
import jax
import jax.numpy as jnp
from jax import lax, random
from jax.experimental import pallas as pl
from jax.experimental.pallas import tpu as pltpu

COP_W = 10.0      # cop_w (module default)
COP_K = 100.0     # cop_k (module default)
EPS = 1e-6


# ----------------------------- Pallas kernel --------------------------------
def _make_stability_kernel(b, n_hd, t_hd, nt_per_chunk, needs_row_mask):
    """Kernel closure over static batch size, true N_HD, tile and chunk size."""
    c3 = 3 * b

    def kernel(g_ref, wb_ref, vol_ref,
               o_cx, o_cz, o_px, o_pz, o_vol, o_w,
               acc_cx, acc_cz, acc_px, acc_pz, acc_vol, acc_w):
        t = pl.program_id(1)

        @pl.when(t == 0)
        def _init():
            for r in (acc_cx, acc_cz, acc_px, acc_pz, acc_vol, acc_w):
                r[...] = jnp.zeros_like(r)

        g = g_ref[...]          # (t_hd, 9B)  gathered base verts, slot-major
        wb = wb_ref[...]        # (t_hd, 3)   barycentric weights
        vol = vol_ref[...]      # (t_hd, B)   per-hd-vertex volume (0 on pad)

        # Sparse hdfy (barycentric combine of the 3 gathered base vertices).
        v_hd = (wb[:, 0:1] * g[:, 0:c3]
                + wb[:, 1:2] * g[:, c3:2 * c3]
                + wb[:, 2:3] * g[:, 2 * c3:3 * c3])        # (t_hd, 3B)
        vx = v_hd[:, 0:b]
        vy = v_hd[:, b:2 * b]                              # height above ground
        vz = v_hd[:, 2 * b:3 * b]

        # Pressure weights.  The exp argument is clamped so the (dead) outside
        # branch stays finite for strongly negative heights; the select picks
        # the inside branch there so the forward value is unchanged.
        w = jnp.where(vy < 0.0,
                      1.0 - COP_K * vy,
                      jnp.exp(-COP_W * jnp.maximum(vy, 0.0)))
        if needs_row_mask:
            # zero-padded rows have wb == 0 -> vy == 0 -> w == 1: mask them.
            row = ((pl.program_id(0) * nt_per_chunk + t) * t_hd
                   + lax.broadcasted_iota(jnp.int32, (t_hd, 1), 0))
            w = jnp.where(row < n_hd, w, 0.0)

        # Elementwise accumulation; sublane reductions deferred to finalize.
        # (y component is zeroed in the loss, so only x / z are accumulated.)
        acc_cx[...] += vx * vol
        acc_cz[...] += vz * vol
        acc_px[...] += vx * w
        acc_pz[...] += vz * w
        acc_vol[...] += vol
        acc_w[...] += w

        @pl.when(t == nt_per_chunk - 1)
        def _finalize():
            o_cx[...] = jnp.sum(acc_cx[...], axis=0, keepdims=True)[None]
            o_cz[...] = jnp.sum(acc_cz[...], axis=0, keepdims=True)[None]
            o_px[...] = jnp.sum(acc_px[...], axis=0, keepdims=True)[None]
            o_pz[...] = jnp.sum(acc_pz[...], axis=0, keepdims=True)[None]
            o_vol[...] = jnp.sum(acc_vol[...], axis=0, keepdims=True)[None]
            o_w[...] = jnp.sum(acc_w[...], axis=0, keepdims=True)[None]

    return kernel


# ------------------------------ Wrapper --------------------------------------
def stability_loss_cop(nz_vid, nz_w, vertices, hd_vid_in_part, per_part_volume,
                       *, t_hd=1024, n_core_chunks=2):
    """Returns the stability loss of shape (B,), float32.

    nz_vid:          (N_HD, 3) int32  base-vertex ids of the sparse hd
                                      up-sampling operator (3 barycentric
                                      non-zeros per hd vertex).
    nz_w:            (N_HD, 3)        barycentric weights.
    vertices:        (B, N_V, 3)      SMPL vertices.
    hd_vid_in_part:  (N_HD, P)        hd-vertex -> part one-hot.
    per_part_volume: (B, P)           per-part volume.
    """
    b, n_v, _ = vertices.shape
    n_hd = nz_vid.shape[0]
    # f32 operands -> native sublane tile is 8.  (Would be 16 for bf16 and 32
    # for int8/fp8 streams, per the tile-alignment review item.)
    assert t_hd > 0 and t_hd % 8 == 0, "t_hd must be a multiple of 8 for f32"
    assert n_core_chunks >= 1

    nt = pl.cdiv(n_hd, t_hd)
    nt_per_chunk = pl.cdiv(nt, n_core_chunks)
    nt_pad = nt_per_chunk * n_core_chunks
    n_hd_pad = nt_pad * t_hd
    needs_row_mask = n_hd_pad != n_hd

    # Coordinate-major packed vertices: verts_cb[v, c*B + bi] = vertices[bi,v,c]
    verts_cb = jnp.transpose(vertices, (1, 2, 0)).reshape(n_v, 3 * b)
    verts_cb = verts_cb.astype(jnp.float32)

    # Sparse hdfy, gather half: pull the 3 base vertices of every hd vertex
    # once (cheap XLA take, <1 MB·B for real SMPL); the weighted combine runs
    # inside the kernel.
    g = verts_cb[nz_vid.astype(jnp.int32)]          # (N_HD, 3, 3B)
    g = g.reshape(n_hd, 9 * b)                      # [slot0 xyzB | slot1 | slot2]
    wb = nz_w.astype(jnp.float32)

    # Per-hd-vertex volume: (N_HD, B).
    vol_hd = jnp.einsum('np,bp->nb', hd_vid_in_part.astype(jnp.float32),
                        per_part_volume.astype(jnp.float32))

    if needs_row_mask:
        pad = n_hd_pad - n_hd
        g = jnp.pad(g, ((0, pad), (0, 0)))
        wb = jnp.pad(wb, ((0, pad), (0, 0)))
        vol_hd = jnp.pad(vol_hd, ((0, pad), (0, 0)))

    kernel = _make_stability_kernel(b, n_hd, t_hd, nt_per_chunk, needs_row_mask)

    def in_map(c, t):
        return (c * nt_per_chunk + t, 0)

    def out_map(c, t):
        return (c, 0, 0)

    partial_shape = jax.ShapeDtypeStruct((n_core_chunks, 1, b), jnp.float32)
    partial_spec = pl.BlockSpec((1, 1, b), out_map)

    # Right-sized VMEM request (double-buffered inputs + accumulators + slack),
    # capped at 48 MiB so the same config is legal on v7x (64 MiB physical).
    lane_pad = lambda n: ((max(n, 1) + 127) // 128) * 128
    in_bytes = t_hd * 4 * (lane_pad(9 * b) + lane_pad(3) + lane_pad(b))
    acc_bytes = 6 * t_hd * 4 * lane_pad(b)
    vmem_limit = min(max(2 * in_bytes + acc_bytes + (4 << 20), 16 << 20),
                     48 << 20)

    partials = pl.pallas_call(
        kernel,
        out_shape=(partial_shape,) * 6,
        grid_spec=pltpu.PrefetchScalarGridSpec(
            num_scalar_prefetch=0,
            grid=(n_core_chunks, nt_per_chunk),
            in_specs=[
                pl.BlockSpec((t_hd, 9 * b), in_map),   # gathered base verts
                pl.BlockSpec((t_hd, 3), in_map),       # barycentric weights
                pl.BlockSpec((t_hd, b), in_map),       # per-hd-vertex volume
            ],
            out_specs=(partial_spec,) * 6,
            scratch_shapes=[pltpu.VMEM((t_hd, b), jnp.float32)
                            for _ in range(6)],
        ),
        compiler_params=pltpu.CompilerParams(
            dimension_semantics=("parallel", "arbitrary"),
            vmem_limit_bytes=vmem_limit),
    )(g, wb, vol_hd)

    # Tiny cross-chunk combine + norm in the wrapper (so the per-TensorCore
    # chunks never need to communicate inside the kernel).
    p_cx, p_cz, p_px, p_pz, p_vol, p_w = partials
    s = lambda a: jnp.sum(a, axis=(0, 1))                  # (B,)
    inv_vol = 1.0 / s(p_vol)
    inv_w = 1.0 / (s(p_w) + EPS)
    dx = s(p_cx) * inv_vol - s(p_px) * inv_w
    dz = s(p_cz) * inv_vol - s(p_pz) * inv_w
    return jnp.sqrt(dx * dx + dz * dz)                     # (B,)


# ------------------------------ JAX glue --------------------------------------
def compute_per_part_volume(vertices, faces, face_part_onehot):
    # TODO(synk): original uses SMPL part-bound pickles + PartVolume mesh
    # closing; here per-part volume is the sum of |signed tetra volumes| of the
    # faces assigned to each part (same output shape/semantics: (B, n_parts)).
    tri = vertices[:, faces]                              # (B, F, 3, 3)
    v0, v1, v2 = tri[:, :, 0], tri[:, :, 1], tri[:, :, 2]
    vol_f = jnp.abs(jnp.einsum('bfi,bfi->bf', v0, jnp.cross(v1, v2)) / 6.0)
    return vol_f @ face_part_onehot                       # (B, P)


def reference_forward(hd_op, vertices, v2p, per_part_vol):
    """Pure-JAX f32 transcription of the PyTorch forward (for validation)."""
    v_hd = jnp.einsum('nv,bvd->bnd', hd_op, vertices)
    vol = jnp.einsum('np,bp->bn', v2p, per_part_vol)[..., None]
    com = jnp.sum(v_hd * vol, axis=1) / jnp.sum(vol, axis=1)
    h = v_hd[:, :, 1]
    inside = (h < 0.0).astype(jnp.float32)
    outside = (h >= 0.0).astype(jnp.float32)
    w = inside * (1.0 - COP_K * h) + outside * jnp.exp(-COP_W * h)
    cop = jnp.sum(v_hd * w[..., None], axis=1) / (
        jnp.sum(w, axis=1, keepdims=True) + EPS)
    com_xz = jnp.stack([com[:, 0], jnp.zeros_like(com[:, 0]), com[:, 2]], axis=1)
    cop_xz = jnp.stack([cop[:, 0], jnp.zeros_like(cop[:, 0]), cop[:, 2]], axis=1)
    return jnp.linalg.norm(com_xz - cop_xz, axis=1)


if __name__ == "__main__":
    # Small, deterministic synthetic setup (scaled-down SMPL: 13776->96 faces,
    # 6890->64 verts, 20000->300 hd verts, parts->8).  N_HD=300 is NOT a
    # multiple of either tile config, so padding + the in-kernel row mask and
    # the all-padding-chunk case are all exercised.
    B, N_V, N_HD, N_FACES, N_PARTS = 2, 64, 300, 96, 8

    key = random.PRNGKey(0)
    k_verts, k_vid, k_w, k_faces = random.split(key, 4)

    vertices = random.uniform(k_verts, (B, N_V, 3), jnp.float32, -1.0, 1.0)

    # Sparse hd up-sampling operator: 3 barycentric non-zeros per hd vertex
    # (same structure as the original index_row_col / values sparse tensor).
    nz_vid = random.randint(k_vid, (N_HD, 3), 0, N_V)
    nz_w = random.uniform(k_w, (N_HD, 3), jnp.float32, 0.05, 1.0)
    nz_w = nz_w / jnp.sum(nz_w, axis=1, keepdims=True)

    # hd-vertex -> part one-hot mapping (stand-in for hd_vid_in_part)
    hd_vid_in_part = jax.nn.one_hot(jnp.arange(N_HD) % N_PARTS, N_PARTS,
                                    dtype=jnp.float32)

    # deterministic faces + face->part assignment
    faces = random.randint(k_faces, (N_FACES, 3), 0, N_V)
    face_part_onehot = jax.nn.one_hot(jnp.arange(N_FACES) % N_PARTS, N_PARTS,
                                      dtype=jnp.float32)
    per_part_vol = compute_per_part_volume(vertices, faces, face_part_onehot)

    # Small-tile config (exercises multi-tile chunks + row masking) ...
    loss_small = stability_loss_cop(nz_vid, nz_w, vertices, hd_vid_in_part,
                                    per_part_vol, t_hd=128, n_core_chunks=2)
    # ... and the production defaults (t_hd=1024; chunk 1 is all padding here).
    loss_big = stability_loss_cop(nz_vid, nz_w, vertices, hd_vid_in_part,
                                  per_part_vol)
    loss_small, loss_big = jax.block_until_ready((loss_small, loss_big))

    # Validate against a true f32 reference on the densified operator
    # (duplicate ids sum, matching torch sparse semantics).
    hd_op_dense = jnp.zeros((N_HD, N_V), jnp.float32)
    hd_op_dense = hd_op_dense.at[jnp.arange(N_HD)[:, None], nz_vid].add(nz_w)
    ref = reference_forward(hd_op_dense, vertices, hd_vid_in_part, per_part_vol)

    assert loss_small.shape == (B,)
    assert jnp.allclose(loss_small, ref, rtol=1e-4, atol=1e-5), (loss_small, ref)
    assert jnp.allclose(loss_big, ref, rtol=1e-4, atol=1e-5), (loss_big, ref)

    print("KERNEL_OK")
</pallas_src>

<mosaic_0001>
module attributes {stable_mosaic.version = 11 : i64} {
  func.func @kernel(%arg0: i32, %arg1: i32, %arg2: memref<128x18xf32, #tpu.memory_space<vmem>>, %arg3: memref<128x3xf32, #tpu.memory_space<vmem>>, %arg4: memref<128x2xf32, #tpu.memory_space<vmem>>, %arg5: memref<1x1x2xf32, #tpu.memory_space<vmem>>, %arg6: memref<1x1x2xf32, #tpu.memory_space<vmem>>, %arg7: memref<1x1x2xf32, #tpu.memory_space<vmem>>, %arg8: memref<1x1x2xf32, #tpu.memory_space<vmem>>, %arg9: memref<1x1x2xf32, #tpu.memory_space<vmem>>, %arg10: memref<1x1x2xf32, #tpu.memory_space<vmem>>, %arg11: memref<128x2xf32, #tpu.memory_space<vmem>>, %arg12: memref<128x2xf32, #tpu.memory_space<vmem>>, %arg13: memref<128x2xf32, #tpu.memory_space<vmem>>, %arg14: memref<128x2xf32, #tpu.memory_space<vmem>>, %arg15: memref<128x2xf32, #tpu.memory_space<vmem>>, %arg16: memref<128x2xf32, #tpu.memory_space<vmem>>) attributes {dimension_semantics = [#tpu.dimension_semantics<parallel>, #tpu.dimension_semantics<arbitrary>], iteration_bounds = array<i64: 2, 2>, scalar_prefetch = 0 : i64, scratch_operands = 6 : i64, tpu.core_type = #tpu.core_type<tc>, window_params = [{transform_indices = @transform_0, window_bounds = array<i64: 128, 18>}, {transform_indices = @transform_1, window_bounds = array<i64: 128, 3>}, {transform_indices = @transform_2, window_bounds = array<i64: 128, 2>}, {transform_indices = @transform_3, window_bounds = array<i64: 1, 1, 2>}, {transform_indices = @transform_4, window_bounds = array<i64: 1, 1, 2>}, {transform_indices = @transform_5, window_bounds = array<i64: 1, 1, 2>}, {transform_indices = @transform_6, window_bounds = array<i64: 1, 1, 2>}, {transform_indices = @transform_7, window_bounds = array<i64: 1, 1, 2>}, {transform_indices = @transform_8, window_bounds = array<i64: 1, 1, 2>}]} {
    %c0_i32 = arith.constant 0 : i32
    %0 = arith.cmpi eq, %arg1, %c0_i32 : i32
    %1 = arith.extui %0 : i1 to i32
    %c0_i32_0 = arith.constant 0 : i32
    %2 = arith.cmpi ne, %1, %c0_i32_0 : i32
    scf.if %2 {
      %cst_36 = arith.constant 0.000000e+00 : f32
      %72 = vector.broadcast %cst_36 : f32 to vector<128x2xf32>
      %c0_37 = arith.constant 0 : index
      %c0_38 = arith.constant 0 : index
      %73 = vector.load %arg11[%c0_37, %c0_38] : memref<128x2xf32, #tpu.memory_space<vmem>>, vector<128x2xf32>
      tpu.vector_store %arg11[%c0_37, %c0_38], %72 {strides = array<i32>} : memref<128x2xf32, #tpu.memory_space<vmem>>, vector<128x2xf32>,
      %cst_39 = arith.constant 0.000000e+00 : f32
      %74 = vector.broadcast %cst_39 : f32 to vector<128x2xf32>
      %c0_40 = arith.constant 0 : index
      %c0_41 = arith.constant 0 : index
      %75 = vector.load %arg12[%c0_40, %c0_41] : memref<128x2xf32, #tpu.memory_space<vmem>>, vector<128x2xf32>
      tpu.vector_store %arg12[%c0_40, %c0_41], %74 {strides = array<i32>} : memref<128x2xf32, #tpu.memory_space<vmem>>, vector<128x2xf32>,
      %cst_42 = arith.constant 0.000000e+00 : f32
      %76 = vector.broadcast %cst_42 : f32 to vector<128x2xf32>
      %c0_43 = arith.constant 0 : index
      %c0_44 = arith.constant 0 : index
      %77 = vector.load %arg13[%c0_43, %c0_44] : memref<128x2xf32, #tpu.memory_space<vmem>>, vector<128x2xf32>
      tpu.vector_store %arg13[%c0_43, %c0_44], %76 {strides = array<i32>} : memref<128x2xf32, #tpu.memory_space<vmem>>, vector<128x2xf32>,
      %cst_45 = arith.constant 0.000000e+00 : f32
      %78 = vector.broadcast %cst_45 : f32 to vector<128x2xf32>
      %c0_46 = arith.constant 0 : index
      %c0_47 = arith.constant 0 : index
      %79 = vector.load %arg14[%c0_46, %c0_47] : memref<128x2xf32, #tpu.memory_space<vmem>>, vector<128x2xf32>
      tpu.vector_store %arg14[%c0_46, %c0_47], %78 {strides = array<i32>} : memref<128x2xf32, #tpu.memory_space<vmem>>, vector<128x2xf32>,
      %cst_48 = arith.constant 0.000000e+00 : f32
      %80 = vector.broadcast %cst_48 : f32 to vector<128x2xf32>
      %c0_49 = arith.constant 0 : index
      %c0_50 = arith.constant 0 : index
      %81 = vector.load %arg15[%c0_49, %c0_50] : memref<128x2xf32, #tpu.memory_space<vmem>>, vector<128x2xf32>
      tpu.vector_store %arg15[%c0_49, %c0_50], %80 {strides = array<i32>} : memref<128x2xf32, #tpu.memory_space<vmem>>, vector<128x2xf32>,
      %cst_51 = arith.constant 0.000000e+00 : f32
      %82 = vector.broadcast %cst_51 : f32 to vector<128x2xf32>
      %c0_52 = arith.constant 0 : index
      %c0_53 = arith.constant 0 : index
      %83 = vector.load %arg16[%c0_52, %c0_53] : memref<128x2xf32, #tpu.memory_space<vmem>>, vector<128x2xf32>
      tpu.vector_store %arg16[%c0_52, %c0_53], %82 {strides = array<i32>} : memref<128x2xf32, #tpu.memory_space<vmem>>, vector<128x2xf32>,
    } else {
    }
    %c0 = arith.constant 0 : index
    %c0_1 = arith.constant 0 : index
    %3 = vector.load %arg2[%c0, %c0_1] : memref<128x18xf32, #tpu.memory_space<vmem>>, vector<128x18xf32>
    %c0_2 = arith.constant 0 : index
    %c0_3 = arith.constant 0 : index
    %4 = vector.load %arg3[%c0_2, %c0_3] : memref<128x3xf32, #tpu.memory_space<vmem>>, vector<128x3xf32>
    %c0_4 = arith.constant 0 : index
    %c0_5 = arith.constant 0 : index
    %5 = vector.load %arg4[%c0_4, %c0_5] : memref<128x2xf32, #tpu.memory_space<vmem>>, vector<128x2xf32>
    %6 = vector.extract_strided_slice %4 {offsets = [0, 0], sizes = [128, 1], strides = [1, 1]} : vector<128x3xf32> to vector<128x1xf32>
    %7 = vector.extract_strided_slice %3 {offsets = [0, 0], sizes = [128, 6], strides = [1, 1]} : vector<128x18xf32> to vector<128x6xf32>
    %8 = vector.broadcast %6 : vector<128x1xf32> to vector<128x6xf32>
    %9 = arith.mulf %8, %7 : vector<128x6xf32>
    %10 = vector.extract_strided_slice %4 {offsets = [0, 1], sizes = [128, 1], strides = [1, 1]} : vector<128x3xf32> to vector<128x1xf32>
    %11 = vector.extract_strided_slice %3 {offsets = [0, 6], sizes = [128, 6], strides = [1, 1]} : vector<128x18xf32> to vector<128x6xf32>
    %12 = vector.broadcast %10 : vector<128x1xf32> to vector<128x6xf32>
    %13 = arith.mulf %12, %11 : vector<128x6xf32>
    %14 = arith.addf %9, %13 : vector<128x6xf32>
    %15 = vector.extract_strided_slice %4 {offsets = [0, 2], sizes = [128, 1], strides = [1, 1]} : vector<128x3xf32> to vector<128x1xf32>
    %16 = vector.extract_strided_slice %3 {offsets = [0, 12], sizes = [128, 6], strides = [1, 1]} : vector<128x18xf32> to vector<128x6xf32>
    %17 = vector.broadcast %15 : vector<128x1xf32> to vector<128x6xf32>
    %18 = arith.mulf %17, %16 : vector<128x6xf32>
    %19 = arith.addf %14, %18 : vector<128x6xf32>
    %20 = vector.extract_strided_slice %19 {offsets = [0, 0], sizes = [128, 2], strides = [1, 1]} : vector<128x6xf32> to vector<128x2xf32>
    %21 = vector.extract_strided_slice %19 {offsets = [0, 2], sizes = [128, 2], strides = [1, 1]} : vector<128x6xf32> to vector<128x2xf32>
    %22 = vector.extract_strided_slice %19 {offsets = [0, 4], sizes = [128, 2], strides = [1, 1]} : vector<128x6xf32> to vector<128x2xf32>
    %cst = arith.constant 0.000000e+00 : f32
    %23 = vector.broadcast %cst : f32 to vector<128x2xf32>
    %24 = arith.cmpf olt, %21, %23 : vector<128x2xf32>
    %cst_6 = arith.constant 1.000000e+02 : f32
    %25 = vector.broadcast %cst_6 : f32 to vector<128x2xf32>
    %26 = arith.mulf %25, %21 : vector<128x2xf32>
    %cst_7 = arith.constant 1.000000e+00 : f32
    %27 = vector.broadcast %cst_7 : f32 to vector<128x2xf32>
    %28 = arith.subf %27, %26 : vector<128x2xf32>
    %cst_8 = arith.constant 0.000000e+00 : f32
    %29 = vector.broadcast %cst_8 : f32 to vector<128x2xf32>
    %30 = arith.maximumf %21, %29 : vector<128x2xf32>
    %cst_9 = arith.constant -1.000000e+01 : f32
    %31 = vector.broadcast %cst_9 : f32 to vector<128x2xf32>
    %32 = arith.mulf %31, %30 : vector<128x2xf32>
    %33 = math.exp %32 : vector<128x2xf32>
    %34 = arith.select %24, %28, %33 : vector<128x2xi1>, vector<128x2xf32>
    %c2_i32 = arith.constant 2 : i32
    %35 = arith.muli %arg0, %c2_i32 : i32
    %36 = arith.addi %35, %arg1 : i32
    %c128_i32 = arith.constant 128 : i32
    %37 = arith.muli %36, %c128_i32 : i32
    %38 = tpu.iota {dimensions = array<i32: 0>} : vector<128x1xi32>
    %39 = vector.broadcast %37 : i32 to vector<128x1xi32>
    %40 = arith.addi %39, %38 : vector<128x1xi32>
    %c300_i32 = arith.constant 300 : i32
    %41 = vector.broadcast %c300_i32 : i32 to vector<128x1xi32>
    %42 = arith.cmpi slt, %40, %41 : vector<128x1xi32>
    %cst_10 = arith.constant 0.000000e+00 : f32
    %43 = vector.shape_cast %42 : vector<128x1xi1> to vector<128x1xi1>
    %44 = vector.broadcast %43 : vector<128x1xi1> to vector<128x2xi1>
    %45 = vector.broadcast %cst_10 : f32 to vector<128x2xf32>
    %46 = arith.select %44, %34, %45 : vector<128x2xi1>, vector<128x2xf32>
    %c0_11 = arith.constant 0 : index
    %c0_12 = arith.constant 0 : index
    %47 = vector.load %arg11[%c0_11, %c0_12] : memref<128x2xf32, #tpu.memory_space<vmem>>, vector<128x2xf32>
    %48 = arith.mulf %20, %5 : vector<128x2xf32>
    %49 = arith.addf %47, %48 : vector<128x2xf32>
    %c0_13 = arith.constant 0 : index
    %c0_14 = arith.constant 0 : index
    %50 = vector.load %arg11[%c0_13, %c0_14] : memref<128x2xf32, #tpu.memory_space<vmem>>, vector<128x2xf32>
    tpu.vector_store %arg11[%c0_13, %c0_14], %49 {strides = array<i32>} : memref<128x2xf32, #tpu.memory_space<vmem>>, vector<128x2xf32>,
    %c0_15 = arith.constant 0 : index
    %c0_16 = arith.constant 0 : index
    %51 = vector.load %arg12[%c0_15, %c0_16] : memref<128x2xf32, #tpu.memory_space<vmem>>, vector<128x2xf32>
    %52 = arith.mulf %22, %5 : vector<128x2xf32>
    %53 = arith.addf %51, %52 : vector<128x2xf32>
    %c0_17 = arith.constant 0 : index
    %c0_18 = arith.constant 0 : index
    %54 = vector.load %arg12[%c0_17, %c0_18] : memref<128x2xf32, #tpu.memory_space<vmem>>, vector<128x2xf32>
    tpu.vector_store %arg12[%c0_17, %c0_18], %53 {strides = array<i32>} : memref<128x2xf32, #tpu.memory_space<vmem>>, vector<128x2xf32>,
    %c0_19 = arith.constant 0 : index
    %c0_20 = arith.constant 0 : index
    %55 = vector.load %arg13[%c0_19, %c0_20] : memref<128x2xf32, #tpu.memory_space<vmem>>, vector<128x2xf32>
    %56 = arith.mulf %20, %46 : vector<128x2xf32>
    %57 = arith.addf %55, %56 : vector<128x2xf32>
    %c0_21 = arith.constant 0 : index
    %c0_22 = arith.constant 0 : index
    %58 = vector.load %arg13[%c0_21, %c0_22] : memref<128x2xf32, #tpu.memory_space<vmem>>, vector<128x2xf32>
    tpu.vector_store %arg13[%c0_21, %c0_22], %57 {strides = array<i32>} : memref<128x2xf32, #tpu.memory_space<vmem>>, vector<128x2xf32>,
    %c0_23 = arith.constant 0 : index
    %c0_24 = arith.constant 0 : index
    %59 = vector.load %arg14[%c0_23, %c0_24] : memref<128x2xf32, #tpu.memory_space<vmem>>, vector<128x2xf32>
    %60 = arith.mulf %22, %46 : vector<128x2xf32>
    %61 = arith.addf %59, %60 : vector<128x2xf32>
    %c0_25 = arith.constant 0 : index
    %c0_26 = arith.constant 0 : index
    %62 = vector.load %arg14[%c0_25, %c0_26] : memref<128x2xf32, #tpu.memory_space<vmem>>, vector<128x2xf32>
    tpu.vector_store %arg14[%c0_25, %c0_26], %61 {strides = array<i32>} : memref<128x2xf32, #tpu.memory_space<vmem>>, vector<128x2xf32>,
    %c0_27 = arith.constant 0 : index
    %c0_28 = arith.constant 0 : index
    %63 = vector.load %arg15[%c0_27, %c0_28] : memref<128x2xf32, #tpu.memory_space<vmem>>, vector<128x2xf32>
    %64 = arith.addf %63, %5 : vector<128x2xf32>
    %c0_29 = arith.constant 0 : index
    %c0_30 = arith.constant 0 : index
    %65 = vector.load %arg15[%c0_29, %c0_30] : memref<128x2xf32, #tpu.memory_space<vmem>>, vector<128x2xf32>
    tpu.vector_store %arg15[%c0_29, %c0_30], %64 {strides = array<i32>} : memref<128x2xf32, #tpu.memory_space<vmem>>, vector<128x2xf32>,
    %c0_31 = arith.constant 0 : index
    %c0_32 = arith.constant 0 : index
    %66 = vector.load %arg16[%c0_31, %c0_32] : memref<128x2xf32, #tpu.memory_space<vmem>>, vector<128x2xf32>
    %67 = arith.addf %66, %46 : vector<128x2xf32>
    %c0_33 = arith.constant 0 : index
    %c0_34 = arith.constant 0 : index
    %68 = vector.load %arg16[%c0_33, %c0_34] : memref<128x2xf32, #tpu.memory_space<vmem>>, vector<128x2xf32>
    tpu.vector_store %arg16[%c0_33, %c0_34], %67 {strides = array<i32>} : memref<128x2xf32, #tpu.memory_space<vmem>>, vector<128x2xf32>,
    %c1_i32 = arith.constant 1 : i32
    %69 = arith.cmpi eq, %arg1, %c1_i32 : i32
    %70 = arith.extui %69 : i1 to i32
    %c0_i32_35 = arith.constant 0 : i32
    %71 = arith.cmpi ne, %70, %c0_i32_35 : i32
    scf.if %71 {
      %c0_36 = arith.constant 0 : index
      %c0_37 = arith.constant 0 : index
      %72 = vector.load %arg11[%c0_36, %c0_37] : memref<128x2xf32, #tpu.memory_space<vmem>>, vector<128x2xf32>
      %cst_38 = arith.constant dense<0.000000e+00> : vector<2xf32>
      %73 = vector.multi_reduction <add>, %72, %cst_38 [0] : vector<128x2xf32> to vector<2xf32>
      %74 = vector.shape_cast %73 : vector<2xf32> to vector<1x2xf32>
      %75 = vector.shape_cast %74 : vector<1x2xf32> to vector<1x1x2xf32>
      %c0_39 = arith.constant 0 : index
      %c0_40 = arith.constant 0 : index
      %c0_41 = arith.constant 0 : index
      %76 = vector.load %arg5[%c0_39, %c0_40, %c0_41] : memref<1x1x2xf32, #tpu.memory_space<vmem>>, vector<1x1x2xf32>
      tpu.vector_store %arg5[%c0_39, %c0_40, %c0_41], %75 {strides = array<i32>} : memref<1x1x2xf32, #tpu.memory_space<vmem>>, vector<1x1x2xf32>,
      %c0_42 = arith.constant 0 : index
      %c0_43 = arith.constant 0 : index
      %77 = vector.load %arg12[%c0_42, %c0_43] : memref<128x2xf32, #tpu.memory_space<vmem>>, vector<128x2xf32>
      %cst_44 = arith.constant dense<0.000000e+00> : vector<2xf32>
      %78 = vector.multi_reduction <add>, %77, %cst_44 [0] : vector<128x2xf32> to vector<2xf32>
      %79 = vector.shape_cast %78 : vector<2xf32> to vector<1x2xf32>
      %80 = vector.shape_cast %79 : vector<1x2xf32> to vector<1x1x2xf32>
      %c0_45 = arith.constant 0 : index
      %c0_46 = arith.constant 0 : index
      %c0_47 = arith.constant 0 : index
      %81 = vector.load %arg6[%c0_45, %c0_46, %c0_47] : memref<1x1x2xf32, #tpu.memory_space<vmem>>, vector<1x1x2xf32>
      tpu.vector_store %arg6[%c0_45, %c0_46, %c0_47], %80 {strides = array<i32>} : memref<1x1x2xf32, #tpu.memory_space<vmem>>, vector<1x1x2xf32>,
      %c0_48 = arith.constant 0 : index
      %c0_49 = arith.constant 0 : index
      %82 = vector.load %arg13[%c0_48, %c0_49] : memref<128x2xf32, #tpu.memory_space<vmem>>, vector<128x2xf32>
      %cst_50 = arith.constant dense<0.000000e+00> : vector<2xf32>
      %83 = vector.multi_reduction <add>, %82, %cst_50 [0] : vector<128x2xf32> to vector<2xf32>
      %84 = vector.shape_cast %83 : vector<2xf32> to vector<1x2xf32>
      %85 = vector.shape_cast %84 : vector<1x2xf32> to vector<1x1x2xf32>
      %c0_51 = arith.constant 0 : index
      %c0_52 = arith.constant 0 : index
      %c0_53 = arith.constant 0 : index
      %86 = vector.load %arg7[%c0_51, %c0_52, %c0_53] : memref<1x1x2xf32, #tpu.memory_space<vmem>>, vector<1x1x2xf32>
      tpu.vector_store %arg7[%c0_51, %c0_52, %c0_53], %85 {strides = array<i32>} : memref<1x1x2xf32, #tpu.memory_space<vmem>>, vector<1x1x2xf32>,
      %c0_54 = arith.constant 0 : index
      %c0_55 = arith.constant 0 : index
      %87 = vector.load %arg14[%c0_54, %c0_55] : memref<128x2xf32, #tpu.memory_space<vmem>>, vector<128x2xf32>
      %cst_56 = arith.constant dense<0.000000e+00> : vector<2xf32>
      %88 = vector.multi_reduction <add>, %87, %cst_56 [0] : vector<128x2xf32> to vector<2xf32>
      %89 = vector.shape_cast %88 : vector<2xf32> to vector<1x2xf32>
      %90 = vector.shape_cast %89 : vector<1x2xf32> to vector<1x1x2xf32>
      %c0_57 = arith.constant 0 : index
      %c0_58 = arith.constant 0 : index
      %c0_59 = arith.constant 0 : index
      %91 = vector.load %arg8[%c0_57, %c0_58, %c0_59] : memref<1x1x2xf32, #tpu.memory_space<vmem>>, vector<1x1x2xf32>
      tpu.vector_store %arg8[%c0_57, %c0_58, %c0_59], %90 {strides = array<i32>} : memref<1x1x2xf32, #tpu.memory_space<vmem>>, vector<1x1x2xf32>,
      %c0_60 = arith.constant 0 : index
      %c0_61 = arith.constant 0 : index
      %92 = vector.load %arg15[%c0_60, %c0_61] : memref<128x2xf32, #tpu.memory_space<vmem>>, vector<128x2xf32>
      %cst_62 = arith.constant dense<0.000000e+00> : vector<2xf32>
      %93 = vector.multi_reduction <add>, %92, %cst_62 [0] : vector<128x2xf32> to vector<2xf32>
      %94 = vector.shape_cast %93 : vector<2xf32> to vector<1x2xf32>
      %95 = vector.shape_cast %94 : vector<1x2xf32> to vector<1x1x2xf32>
      %c0_63 = arith.constant 0 : index
      %c0_64 = arith.constant 0 : index
      %c0_65 = arith.constant 0 : index
      %96 = vector.load %arg9[%c0_63, %c0_64, %c0_65] : memref<1x1x2xf32, #tpu.memory_space<vmem>>, vector<1x1x2xf32>
      tpu.vector_store %arg9[%c0_63, %c0_64, %c0_65], %95 {strides = array<i32>} : memref<1x1x2xf32, #tpu.memory_space<vmem>>, vector<1x1x2xf32>,
      %c0_66 = arith.constant 0 : index
      %c0_67 = arith.constant 0 : index
      %97 = vector.load %arg16[%c0_66, %c0_67] : memref<128x2xf32, #tpu.memory_space<vmem>>, vector<128x2xf32>
      %cst_68 = arith.constant dense<0.000000e+00> : vector<2xf32>
      %98 = vector.multi_reduction <add>, %97, %cst_68 [0] : vector<128x2xf32> to vector<2xf32>
      %99 = vector.shape_cast %98 : vector<2xf32> to vector<1x2xf32>
      %100 = vector.shape_cast %99 : vector<1x2xf32> to vector<1x1x2xf32>
      %c0_69 = arith.constant 0 : index
      %c0_70 = arith.constant 0 : index
      %c0_71 = arith.constant 0 : index
      %101 = vector.load %arg10[%c0_69, %c0_70, %c0_71] : memref<1x1x2xf32, #tpu.memory_space<vmem>>, vector<1x1x2xf32>
      tpu.vector_store %arg10[%c0_69, %c0_70, %c0_71], %100 {strides = array<i32>} : memref<1x1x2xf32, #tpu.memory_space<vmem>>, vector<1x1x2xf32>,
    } else {
    }
    return
  }
  func.func @transform_0(%arg0: i32, %arg1: i32) -> (i32, i32) {
    %c2_i32 = arith.constant 2 : i32
    %0 = arith.muli %arg0, %c2_i32 : i32
    %1 = arith.addi %0, %arg1 : i32
    %c0_i32 = arith.constant 0 : i32
    %c0_i32_0 = arith.constant 0 : i32
    return %1, %c0_i32 : i32, i32
  }
  func.func @transform_1(%arg0: i32, %arg1: i32) -> (i32, i32) {
    %c2_i32 = arith.constant 2 : i32
    %0 = arith.muli %arg0, %c2_i32 : i32
    %1 = arith.addi %0, %arg1 : i32
    %c0_i32 = arith.constant 0 : i32
    %c0_i32_0 = arith.constant 0 : i32
    return %1, %c0_i32 : i32, i32
  }
  func.func @transform_2(%arg0: i32, %arg1: i32) -> (i32, i32) {
    %c2_i32 = arith.constant 2 : i32
    %0 = arith.muli %arg0, %c2_i32 : i32
    %1 = arith.addi %0, %arg1 : i32
    %c0_i32 = arith.constant 0 : i32
    %c0_i32_0 = arith.constant 0 : i32
    return %1, %c0_i32 : i32, i32
  }
  func.func @transform_3(%arg0: i32, %arg1: i32) -> (i32, i32, i32) {
    %c0_i32 = arith.constant 0 : i32
    %c0_i32_0 = arith.constant 0 : i32
    %c0_i32_1 = arith.constant 0 : i32
    return %arg0, %c0_i32, %c0_i32_0 : i32, i32, i32
  }
  func.func @transform_4(%arg0: i32, %arg1: i32) -> (i32, i32, i32) {
    %c0_i32 = arith.constant 0 : i32
    %c0_i32_0 = arith.constant 0 : i32
    %c0_i32_1 = arith.constant 0 : i32
    return %arg0, %c0_i32, %c0_i32_0 : i32, i32, i32
  }
  func.func @transform_5(%arg0: i32, %arg1: i32) -> (i32, i32, i32) {
    %c0_i32 = arith.constant 0 : i32
    %c0_i32_0 = arith.constant 0 : i32
    %c0_i32_1 = arith.constant 0 : i32
    return %arg0, %c0_i32, %c0_i32_0 : i32, i32, i32
  }
  func.func @transform_6(%arg0: i32, %arg1: i32) -> (i32, i32, i32) {
    %c0_i32 = arith.constant 0 : i32
    %c0_i32_0 = arith.constant 0 : i32
    %c0_i32_1 = arith.constant 0 : i32
    return %arg0, %c0_i32, %c0_i32_0 : i32, i32, i32
  }
  func.func @transform_7(%arg0: i32, %arg1: i32) -> (i32, i32, i32) {
    %c0_i32 = arith.constant 0 : i32
    %c0_i32_0 = arith.constant 0 : i32
    %c0_i32_1 = arith.constant 0 : i32
    return %arg0, %c0_i32, %c0_i32_0 : i32, i32, i32
  }
  func.func @transform_8(%arg0: i32, %arg1: i32) -> (i32, i32, i32) {
    %c0_i32 = arith.constant 0 : i32
    %c0_i32_0 = arith.constant 0 : i32
    %c0_i32_1 = arith.constant 0 : i32
    return %arg0, %c0_i32, %c0_i32_0 : i32, i32, i32
  }
}

</mosaic_0001>

<llo_original>
// kernel: tpu_custom_call.1
$region0: #{tpu_custom_call.1}
  #allocation0 [shape = 'u32[]', space=smem, size = 0x4, offset = 0x4, fixed_abs, tag = 'smem constant byte address 0x4 - core index']
  #allocation1 [shape = 'u32[144,128]{1,0:T(1,128)}', space=vmem, size = 0x12000, scoped, tag = 'internal scratch']
  #allocation2 [shape = 'f32[128,2]{1,0:T(8,128)}', space=vmem, size = 0x10000, scoped, tag = 'scratch operand']
  #allocation3 [shape = 'f32[128,2]{1,0:T(8,128)}', space=vmem, size = 0x10000, scoped, tag = 'scratch operand']
  #allocation4 [shape = 'f32[128,2]{1,0:T(8,128)}', space=vmem, size = 0x10000, scoped, tag = 'scratch operand']
  #allocation5 [shape = 'f32[128,2]{1,0:T(8,128)}', space=vmem, size = 0x10000, scoped, tag = 'scratch operand']
  #allocation6 [shape = 'f32[128,2]{1,0:T(8,128)}', space=vmem, size = 0x10000, scoped, tag = 'scratch operand']
  #allocation7 [shape = 'f32[128,2]{1,0:T(8,128)}', space=vmem, size = 0x10000, scoped, tag = 'scratch operand']
  %s0 = inlined_call_operand.vmem [shape: f32[512,18], index: 0, kind: input, shape index: {}]
  %s1 = inlined_call_operand.vmem [shape: f32[512,3], index: 1, kind: input, shape index: {}]
  %s2 = inlined_call_operand.vmem [shape: f32[512,2], index: 2, kind: input, shape index: {}]
  %s3 = inlined_call_operand.hbm [shape: f32[2,1,2], index: 3, kind: output, shape index: {0}]
  %s4 = inlined_call_operand.hbm [shape: f32[2,1,2], index: 4, kind: output, shape index: {1}]
  %s5 = inlined_call_operand.hbm [shape: f32[2,1,2], index: 5, kind: output, shape index: {2}]
  %s6 = inlined_call_operand.hbm [shape: f32[2,1,2], index: 6, kind: output, shape index: {3}]
  %s7 = inlined_call_operand.hbm [shape: f32[2,1,2], index: 7, kind: output, shape index: {4}]
  %s8 = inlined_call_operand.hbm [shape: f32[2,1,2], index: 8, kind: output, shape index: {5}]
  %9 = xla_tuple %s3, %s4, %s5, %s6, %s7, %s8
  %s10 = sld [smem:[#allocation0]]
  $region93: #{tpu_custom_call.1} parent=0
    _
  %s12 = ssub.s32 1, %s10
  %s13 = scalar_select 0, %s12, %s10
  $region1: #{tpu_custom_call.1} parent=0
    #allocation8 [shape = 'u8[1024]{0}', space=vmem, size = 0x400, scoped, tag = 'output window, operand 0']
    #allocation9 [shape = 's32[2]{0}', space=sflag, size = 0x8, scoped, tag = 'scoped memory for tpu_custom_call.1']
    #allocation10 [shape = 'u8[1024]{0}', space=vmem, size = 0x400, scoped, tag = 'output window, operand 1']
    #allocation11 [shape = 's32[2]{0}', space=sflag, size = 0x8, scoped, tag = 'scoped memory for tpu_custom_call.1']
    #allocation12 [shape = 'u8[1024]{0}', space=vmem, size = 0x400, scoped, tag = 'output window, operand 2']
    #allocation13 [shape = 'u8[1024]{0}', space=vmem, size = 0x400, scoped, tag = 'output window, operand 3']
    #allocation14 [shape = 's32[2]{0}', space=sflag, size = 0x8, scoped, tag = 'scoped memory for tpu_custom_call.1']
    #allocation15 [shape = 'u8[1024]{0}', space=vmem, size = 0x400, scoped, tag = 'output window, operand 4']
    #allocation16 [shape = 'u8[1024]{0}', space=vmem, size = 0x400, scoped, tag = 'output window, operand 5']
    #allocation17 [shape = 's32[2]{0}', space=sflag, size = 0x8, scoped, tag = 'scoped memory for tpu_custom_call.1']
    %14 = vsyncpa [#allocation9], 0
    %s15 = scalar_lea.sflag [#allocation9], 1
    %16 = vsyncpa %s15, 0
    %17 = vsyncpa [#allocation11], 0
    %s18 = scalar_lea.sflag [#allocation11], 1
    %19 = vsyncpa %s18, 0
    %20 = vsyncpa [#allocation14], 0
    %s21 = scalar_lea.sflag [#allocation14], 1
    %22 = vsyncpa %s21, 0
    %23 = vsyncpa [#allocation17], 0
    %s24 = scalar_lea.sflag [#allocation17], 1
    %25 = vsyncpa %s24, 0
    loop: start=0, step=1, limit=6
    $region2: #{tpu_custom_call.1} parent=1 // loop_pre_header
      _
    $region3: #{tpu_custom_call.1} parent=1 // loop_header
      %s27 = sphi 0, %s31
      %p28 = scmp.ge.s32.totalorder %s27, 6
      %s34 = sphi 0, %s46
      %s35 = sphi 0, %s42
      %s36 = sphi 0, %s34
      %s37 = sphi 0, %s35
      %s38 = sphi 0, %s36
      %s39 = sphi 0, %s37
      %s53 = sphi 0, %s55
      %s56 = sphi 0, %s53
      %s57 = sphi 0, %s56
      %s73 = sphi 0, %s57
      %s83 = sphi 0, %s85
      %s86 = sphi 0, %s83
      %s87 = sphi 0, %s86
      %s103 = sphi 0, %s87
      %s113 = sphi 0, %s115
      %s116 = sphi 0, %s113
      %s117 = sphi 0, %s116
      %s133 = sphi 0, %s117
      %s139 = sphi 0, %s141
      %s142 = sphi 0, %s139
      %s143 = sphi 0, %s142
      %s159 = sphi 0, %s143
      %s165 = sphi 0, %s167
      %s168 = sphi 0, %s165
      %s169 = sphi 0, %s168
      %s185 = sphi 0, %s169
      %s191 = sphi 0, %s193
      %s194 = sphi 0, %s191
      %s195 = sphi 0, %s194
      %s211 = sphi 0, %s195
      %s217 = sphi 0, %s219
      %s220 = sphi 0, %s217
      %s221 = sphi 0, %s220
      %s237 = sphi 0, %s221
      %s243 = sphi 0, %s245
      %s246 = sphi 0, %s243
      %s247 = sphi 0, %s246
      %s263 = sphi 0, %s247
      %s269 = sphi 0, %s271
      %s272 = sphi 0, %s269
      %s273 = sphi 0, %s272
      %s289 = sphi 0, %s273
    $region4: #{tpu_custom_call.1} parent=1 // loop_header_branch
      %30 = sbr.rel (%p28) target = $region8
    $region5: #{tpu_custom_call.1} parent=1 // loop_body
      %s32 = ssub.s32 %s27, 1
      %s33 = ssub.s32 %s27, 2
      %s40 = sadd.s32 1, %s35
      %p41 = scmp.ge.s32.totalorder %s40, 2
      %s42 = scalar_select %p41, 0, %s40
      %s43 = sadd.s32 1, %s34
      %s44 = scalar_select %p41, %s43, %s34
      %p45 = scmp.ge.s32.totalorder %s44, 2
      %s46 = scalar_select %p45, 0, %s44
      %s47 = smul.u32 %s34, 2
      %s48 = sadd.s32 %s47, %s35
      %s49 = smul.u32 %s46, 2
      %s50 = sadd.s32 %s49, %s42
      %s51 = ssub.s32 %s48, %s50
      %p52 = scmp.eq.s32.totalorder %s51, 0
      %s54 = sadd.s32 %s53, 1
      %s55 = scalar_select %p52, %s53, %s54
      %p58 = pneg %p52
      %p59 = scmp.eq.s32.totalorder %s27, 3
      %p60 = por %p58, %p59
      %p61 = scmp.ne.s32.totalorder %s53, %s56
      %p62 = scmp.eq.s32.totalorder %s27, 0
      %p63 = por %p61, %p62
      %p64 = scmp.ne.s32.totalorder %s53, %s56
      %p65 = scmp.eq.s32.totalorder %s32, 3
      %p66 = por %p64, %p65
      %p67 = scmp.ne.s32.totalorder %s56, %s57
      %p68 = scmp.eq.s32.totalorder %s32, 0
      %p69 = por %p67, %p68
      %p70 = scmp.ne.s32.totalorder %s56, %s57
      %p71 = scmp.eq.s32.totalorder %s33, 3
      %p72 = por %p70, %p71
      %p74 = scmp.ne.s32.totalorder %s57, %s73
      %p75 = scmp.eq.s32.totalorder %s33, 0
      %p76 = por %p74, %p75
      %s77 = smul.u32 %s34, 2
      %s78 = sadd.s32 %s77, %s35
      %s79 = smul.u32 %s46, 2
      %s80 = sadd.s32 %s79, %s42
      %s81 = ssub.s32 %s78, %s80
      %p82 = scmp.eq.s32.totalorder %s81, 0
      %s84 = sadd.s32 %s83, 1
      %s85 = scalar_select %p82, %s83, %s84
      %p88 = pneg %p82
      %p89 = scmp.eq.s32.totalorder %s27, 3
      %p90 = por %p88, %p89
      %p91 = scmp.ne.s32.totalorder %s83, %s86
      %p92 = scmp.eq.s32.totalorder %s27, 0
      %p93 = por %p91, %p92
      %p94 = scmp.ne.s32.totalorder %s83, %s86
      %p95 = scmp.eq.s32.totalorder %s32, 3
      %p96 = por %p94, %p95
      %p97 = scmp.ne.s32.totalorder %s86, %s87
      %p98 = scmp.eq.s32.totalorder %s32, 0
      %p99 = por %p97, %p98
      %p100 = scmp.ne.s32.totalorder %s86, %s87
      %p101 = scmp.eq.s32.totalorder %s33, 3
      %p102 = por %p100, %p101
      %p104 = scmp.ne.s32.totalorder %s87, %s103
      %p105 = scmp.eq.s32.totalorder %s33, 0
      %p106 = por %p104, %p105
      %s107 = smul.u32 %s34, 2
      %s108 = sadd.s32 %s107, %s35
      %s109 = smul.u32 %s46, 2
      %s110 = sadd.s32 %s109, %s42
      %s111 = ssub.s32 %s108, %s110
      %p112 = scmp.eq.s32.totalorder %s111, 0
      %s114 = sadd.s32 %s113, 1
      %s115 = scalar_select %p112, %s113, %s114
      %p118 = pneg %p112
      %p119 = scmp.eq.s32.totalorder %s27, 3
      %p120 = por %p118, %p119
      %p121 = scmp.ne.s32.totalorder %s113, %s116
      %p122 = scmp.eq.s32.totalorder %s27, 0
      %p123 = por %p121, %p122
      %p124 = scmp.ne.s32.totalorder %s113, %s116
      %p125 = scmp.eq.s32.totalorder %s32, 3
      %p126 = por %p124, %p125
      %p127 = scmp.ne.s32.totalorder %s116, %s117
      %p128 = scmp.eq.s32.totalorder %s32, 0
      %p129 = por %p127, %p128
      %p130 = scmp.ne.s32.totalorder %s116, %s117
      %p131 = scmp.eq.s32.totalorder %s33, 3
      %p132 = por %p130, %p131
      %p134 = scmp.ne.s32.totalorder %s117, %s133
      %p135 = scmp.eq.s32.totalorder %s33, 0
      %p136 = por %p134, %p135
      %s137 = ssub.s32 %s34, %s46
      %p138 = scmp.eq.s32.totalorder %s137, 0
      %s140 = sadd.s32 %s139, 1
      %s141 = scalar_select %p138, %s139, %s140
      %p144 = pneg %p138
      %p145 = scmp.eq.s32.totalorder %s27, 3
      %p146 = por %p144, %p145
      %p147 = scmp.ne.s32.totalorder %s139, %s142
      %p148 = scmp.eq.s32.totalorder %s27, 0
      %p149 = por %p147, %p148
      %p150 = scmp.ne.s32.totalorder %s139, %s142
      %p151 = scmp.eq.s32.totalorder %s32, 3
      %p152 = por %p150, %p151
      %p153 = scmp.ne.s32.totalorder %s142, %s143
      %p154 = scmp.eq.s32.totalorder %s32, 0
      %p155 = por %p153, %p154
      %p156 = scmp.ne.s32.totalorder %s142, %s143
      %p157 = scmp.eq.s32.totalorder %s33, 3
      %p158 = por %p156, %p157
      %p160 = scmp.ne.s32.totalorder %s143, %s159
      %p161 = scmp.eq.s32.totalorder %s33, 0
      %p162 = por %p160, %p161
      %s163 = ssub.s32 %s34, %s46
      %p164 = scmp.eq.s32.totalorder %s163, 0
      %s166 = sadd.s32 %s165, 1
      %s167 = scalar_select %p164, %s165, %s166
      %p170 = pneg %p164
      %p171 = scmp.eq.s32.totalorder %s27, 3
      %p172 = por %p170, %p171
      %p173 = scmp.ne.s32.totalorder %s165, %s168
      %p174 = scmp.eq.s32.totalorder %s27, 0
      %p175 = por %p173, %p174
      %p176 = scmp.ne.s32.totalorder %s165, %s168
      %p177 = scmp.eq.s32.totalorder %s32, 3
      %p178 = por %p176, %p177
      %p179 = scmp.ne.s32.totalorder %s168, %s169
      %p180 = scmp.eq.s32.totalorder %s32, 0
      %p181 = por %p179, %p180
      %p182 = scmp.ne.s32.totalorder %s168, %s169
      %p183 = scmp.eq.s32.totalorder %s33, 3
      %p184 = por %p182, %p183
      %p186 = scmp.ne.s32.totalorder %s169, %s185
      %p187 = scmp.eq.s32.totalorder %s33, 0
      %p188 = por %p186, %p187
      %s189 = ssub.s32 %s34, %s46
      %p190 = scmp.eq.s32.totalorder %s189, 0
      %s192 = sadd.s32 %s191, 1
      %s193 = scalar_select %p190, %s191, %s192
      %p196 = pneg %p190
      %p197 = scmp.eq.s32.totalorder %s27, 3
      %p198 = por %p196, %p197
      %p199 = scmp.ne.s32.totalorder %s191, %s194
      %p200 = scmp.eq.s32.totalorder %s27, 0
      %p201 = por %p199, %p200
      %p202 = scmp.ne.s32.totalorder %s191, %s194
      %p203 = scmp.eq.s32.totalorder %s32, 3
      %p204 = por %p202, %p203
      %p205 = scmp.ne.s32.totalorder %s194, %s195
      %p206 = scmp.eq.s32.totalorder %s32, 0
      %p207 = por %p205, %p206
      %p208 = scmp.ne.s32.totalorder %s194, %s195
      %p209 = scmp.eq.s32.totalorder %s33, 3
      %p210 = por %p208, %p209
      %p212 = scmp.ne.s32.totalorder %s195, %s211
      %p213 = scmp.eq.s32.totalorder %s33, 0
      %p214 = por %p212, %p213
      %s215 = ssub.s32 %s34, %s46
      %p216 = scmp.eq.s32.totalorder %s215, 0
      %s218 = sadd.s32 %s217, 1
      %s219 = scalar_select %p216, %s217, %s218
      %p222 = pneg %p216
      %p223 = scmp.eq.s32.totalorder %s27, 3
      %p224 = por %p222, %p223
      %p225 = scmp.ne.s32.totalorder %s217, %s220
      %p226 = scmp.eq.s32.totalorder %s27, 0
      %p227 = por %p225, %p226
      %p228 = scmp.ne.s32.totalorder %s217, %s220
      %p229 = scmp.eq.s32.totalorder %s32, 3
      %p230 = por %p228, %p229
      %p231 = scmp.ne.s32.totalorder %s220, %s221
      %p232 = scmp.eq.s32.totalorder %s32, 0
      %p233 = por %p231, %p232
      %p234 = scmp.ne.s32.totalorder %s220, %s221
      %p235 = scmp.eq.s32.totalorder %s33, 3
      %p236 = por %p234, %p235
      %p238 = scmp.ne.s32.totalorder %s221, %s237
      %p239 = scmp.eq.s32.totalorder %s33, 0
      %p240 = por %p238, %p239
      %s241 = ssub.s32 %s34, %s46
      %p242 = scmp.eq.s32.totalorder %s241, 0
      %s244 = sadd.s32 %s243, 1
      %s245 = scalar_select %p242, %s243, %s244
      %p248 = pneg %p242
      %p249 = scmp.eq.s32.totalorder %s27, 3
      %p250 = por %p248, %p249
      %p251 = scmp.ne.s32.totalorder %s243, %s246
      %p252 = scmp.eq.s32.totalorder %s27, 0
      %p253 = por %p251, %p252
      %p254 = scmp.ne.s32.totalorder %s243, %s246
      %p255 = scmp.eq.s32.totalorder %s32, 3
      %p256 = por %p254, %p255
      %p257 = scmp.ne.s32.totalorder %s246, %s247
      %p258 = scmp.eq.s32.totalorder %s32, 0
      %p259 = por %p257, %p258
      %p260 = scmp.ne.s32.totalorder %s246, %s247
      %p261 = scmp.eq.s32.totalorder %s33, 3
      %p262 = por %p260, %p261
      %p264 = scmp.ne.s32.totalorder %s247, %s263
      %p265 = scmp.eq.s32.totalorder %s33, 0
      %p266 = por %p264, %p265
      %s267 = ssub.s32 %s34, %s46
      %p268 = scmp.eq.s32.totalorder %s267, 0
      %s270 = sadd.s32 %s269, 1
      %s271 = scalar_select %p268, %s269, %s270
      %p274 = pneg %p268
      %p275 = scmp.eq.s32.totalorder %s27, 3
      %p276 = por %p274, %p275
      %p277 = scmp.ne.s32.totalorder %s269, %s272
      %p278 = scmp.eq.s32.totalorder %s27, 0
      %p279 = por %p277, %p278
      %p280 = scmp.ne.s32.totalorder %s269, %s272
      %p281 = scmp.eq.s32.totalorder %s32, 3
      %p282 = por %p280, %p281
      %p283 = scmp.ne.s32.totalorder %s272, %s273
      %p284 = scmp.eq.s32.totalorder %s32, 0
      %p285 = por %p283, %p284
      %p286 = scmp.ne.s32.totalorder %s272, %s273
      %p287 = scmp.eq.s32.totalorder %s33, 3
      %p288 = por %p286, %p287
      %p290 = scmp.ne.s32.totalorder %s273, %s289
      %p291 = scmp.eq.s32.totalorder %s33, 0
      %p292 = por %p290, %p291
      %p293 = scmp.le.s32.totalorder 1, %s27
      %p294 = scmp.lt.s32.totalorder %s27, 5
      %p295 = pnand %p293, %p294
      %p296 = pneg %p295
      // Predicated region
      $region9: #{tpu_custom_call.1} parent=5 // pred_check
        _
      $region10: #{tpu_custom_call.1} parent=5 // pred_check_branch
        %298 = sbr.rel (%p295) target = $region12
      $region11: #{tpu_custom_call.1} parent=5 // pred_region
        %s299 = ssub.s32 %s27, 1
      $region12: #{tpu_custom_call.1} parent=5 // pred_fallthru
        _
      %p300 = scmp.lt.s32.totalorder %s27, 4
      // Predicated region
      $region13: #{tpu_custom_call.1} parent=5 // pred_check
        %p301 = pneg %p300
      $region14: #{tpu_custom_call.1} parent=5 // pred_check_branch
        %303 = sbr.rel (%p301) target = $region16
      $region15: #{tpu_custom_call.1} parent=5 // pred_region
        // Predicated region
        $region17: #{tpu_custom_call.1} parent=15 // pred_check
          %p304 = pneg %p63
        $region18: #{tpu_custom_call.1} parent=15 // pred_check_branch
          %306 = sbr.rel (%p304) target = $region20
        $region19: #{tpu_custom_call.1} parent=15 // pred_region
          %s307 = smul.u32 %s34, 2
          %s308 = sadd.s32 %s307, %s35
          %s309 = smul.u32 16, %s308
          %p310 = scmp.lt.s32.totalorder %s309, 63
          %s311 = scalar_select %p310, %s309, 63
          %s312 = smul.addr %s311, 8
          %s313 = scalar_lea.vmem %s0, %s312
          %s314 = smul.u32 %s34, 2
          %s315 = sadd.s32 %s314, %s35
          %s316 = smul.u32 16, %s315
        $region20: #{tpu_custom_call.1} parent=15 // pred_fallthru
          _
        // Predicated region
        $region21: #{tpu_custom_call.1} parent=15 // pred_check
          %p317 = pneg %p93
        $region22: #{tpu_custom_call.1} parent=15 // pred_check_branch
          %319 = sbr.rel (%p317) target = $region24
        $region23: #{tpu_custom_call.1} parent=15 // pred_region
          %s320 = smul.u32 %s34, 2
          %s321 = sadd.s32 %s320, %s35
          %s322 = smul.u32 16, %s321
          %p323 = scmp.lt.s32.totalorder %s322, 63
          %s324 = scalar_select %p323, %s322, 63
          %s325 = smul.addr %s324, 8
          %s326 = scalar_lea.vmem %s1, %s325
          %s327 = smul.u32 %s34, 2
          %s328 = sadd.s32 %s327, %s35
          %s329 = smul.u32 16, %s328
        $region24: #{tpu_custom_call.1} parent=15 // pred_fallthru
          _
        // Predicated region
        $region25: #{tpu_custom_call.1} parent=15 // pred_check
          %p330 = pneg %p123
        $region26: #{tpu_custom_call.1} parent=15 // pred_check_branch
          %332 = sbr.rel (%p330) target = $region28
        $region27: #{tpu_custom_call.1} parent=15 // pred_region
          %s333 = smul.u32 %s34, 2
          %s334 = sadd.s32 %s333, %s35
          %s335 = smul.u32 16, %s334
          %p336 = scmp.lt.s32.totalorder %s335, 63
          %s337 = scalar_select %p336, %s335, 63
          %s338 = smul.addr %s337, 8
          %s339 = scalar_lea.vmem %s2, %s338
          %s340 = smul.u32 %s34, 2
          %s341 = sadd.s32 %s340, %s35
          %s342 = smul.u32 16, %s341
        $region28: #{tpu_custom_call.1} parent=15 // pred_fallthru
          _
      $region16: #{tpu_custom_call.1} parent=5 // pred_fallthru
        _
      %p343 = scmp.le.s32.totalorder 1, %s27
      %p344 = scmp.lt.s32.totalorder %s27, 5
      %p345 = pnand %p343, %p344
      %p346 = pneg %p345
      // Predicated region
      $region29: #{tpu_custom_call.1} parent=5 // pred_check
        _
      $region30: #{tpu_custom_call.1} parent=5 // pred_check_branch
        %348 = sbr.rel (%p345) target = $region32
      $region31: #{tpu_custom_call.1} parent=5 // pred_region
        %s349 = ssub.s32 %s27, 1
        %s350 = smul.u32 %s36, 2
        %s351 = sadd.s32 %s350, %s37
        %s352 = smul.u32 16, %s351
        %p353 = scmp.lt.s32.totalorder %s352, 63
        %s354 = scalar_select %p353, %s352, 63
        %s355 = smul.addr %s354, 8
        %s356 = scalar_lea.vmem %s0, %s355
        %p357 = pneg %p69
        %p358 = pneg %p66
        %s359 = smul.u32 %s36, 2
        %s360 = sadd.s32 %s359, %s37
        %s361 = smul.u32 16, %s360
        %p362 = scmp.lt.s32.totalorder %s361, 63
        %s363 = scalar_select %p362, %s361, 63
        %s364 = smul.addr %s363, 8
        %s365 = scalar_lea.vmem %s1, %s364
        %p366 = pneg %p99
        %p367 = pneg %p96
        %s368 = smul.u32 %s36, 2
        %s369 = sadd.s32 %s368, %s37
        %s370 = smul.u32 16, %s369
        %p371 = scmp.lt.s32.totalorder %s370, 63
        %s372 = scalar_select %p371, %s370, 63
        %s373 = smul.addr %s372, 8
        %s374 = scalar_lea.vmem %s2, %s373
        %p375 = pneg %p129
        %p376 = pneg %p126
        %p377 = pneg %p155
        %p378 = pneg %p152
        %s379 = sand.u32 %s142, 1
        %s380 = scalar_lea.sflag [#allocation9], %s379
        %s381 = sand.u32 %s142, 1
        %s382 = scalar_lea.vmem [#allocation8], %s381
        %p383 = pneg %p181
        %p384 = pneg %p178
        %s385 = sand.u32 %s32, 1
        %s386 = scalar_lea.sflag [#allocation11], %s385
        %s387 = sand.u32 %s168, 1
        %s388 = scalar_lea.vmem [#allocation10], %s387
        %p389 = pneg %p207
        %p390 = pneg %p204
        %s391 = sand.u32 %s32, 1
        %s392 = scalar_lea.sflag [#allocation11], %s391
        %s393 = sand.u32 %s194, 1
        %s394 = scalar_lea.vmem [#allocation12], %s393
        %p395 = pneg %p233
        %p396 = pneg %p230
        %s397 = sand.u32 %s32, 1
        %s398 = scalar_lea.sflag [#allocation14], %s397
        %s399 = sand.u32 %s220, 1
        %s400 = scalar_lea.vmem [#allocation13], %s399
        %p401 = pneg %p259
        %p402 = pneg %p256
        %s403 = sand.u32 %s32, 1
        %s404 = scalar_lea.sflag [#allocation14], %s403
        %s405 = sand.u32 %s246, 1
        %s406 = scalar_lea.vmem [#allocation15], %s405
        %p407 = pneg %p285
        %p408 = pneg %p282
        %s409 = sand.u32 %s272, 1
        %s410 = scalar_lea.sflag [#allocation17], %s409
        %s411 = sand.u32 %s272, 1
        %s412 = scalar_lea.vmem [#allocation16], %s411
        %s413 = smul.u32 %s36, 2
        %s414 = sadd.s32 %s413, %s37
        %s415 = smul.u32 16, %s414
        %p416 = scmp.lt.s32.totalorder %s415, 63
        %s417 = scalar_select %p416, %s415, 63
        %s418 = smul.addr %s417, 8
        %s419 = scalar_lea.vmem %s0, %s418
        %s420 = smul.u32 %s36, 2
        %s421 = sadd.s32 %s420, %s37
        %s422 = smul.u32 16, %s421
        %s423 = smul.u32 %s36, 2
        %s424 = sadd.s32 %s423, %s37
        %s425 = smul.u32 16, %s424
        %p426 = scmp.lt.s32.totalorder %s425, 63
        %s427 = scalar_select %p426, %s425, 63
        %s428 = smul.addr %s427, 8
        %s429 = scalar_lea.vmem %s1, %s428
        %s430 = smul.u32 %s36, 2
        %s431 = sadd.s32 %s430, %s37
        %s432 = smul.u32 16, %s431
        %s433 = smul.u32 %s36, 2
        %s434 = sadd.s32 %s433, %s37
        %s435 = smul.u32 16, %s434
        %p436 = scmp.lt.s32.totalorder %s435, 63
        %s437 = scalar_select %p436, %s435, 63
        %s438 = smul.addr %s437, 8
        %s439 = scalar_lea.vmem %s2, %s438
        %s440 = smul.u32 %s36, 2
        %s441 = sadd.s32 %s440, %s37
        %s442 = smul.u32 16, %s441
        %p443 = scmp.eq.s32.totalorder %s37, 0
        // Predicated region
        $region33: #{tpu_custom_call.1} parent=31 // pred_check
          %p444 = pneg %p443
        $region34: #{tpu_custom_call.1} parent=31 // pred_check_branch
          %446 = sbr.rel (%p444) target = $region36
        $region35: #{tpu_custom_call.1} parent=31 // pred_region
          %vm447 = vcmask 15360
          %448 = vst.msk [vmem:[#allocation2] sm:$0xff] %vm447, 0.0
          %449 = vst.msk [vmem:[#allocation2 + $0x8] sm:$0xff] %vm447, 0.0
          %450 = vst.msk [vmem:[#allocation2 + $0x10] sm:$0xff] %vm447, 0.0
          %451 = vst.msk [vmem:[#allocation2 + $0x18] sm:$0xff] %vm447, 0.0
          %452 = vst.msk [vmem:[#allocation2 + $0x20] sm:$0xff] %vm447, 0.0
          %453 = vst.msk [vmem:[#allocation2 + $0x28] sm:$0xff] %vm447, 0.0
          %454 = vst.msk [vmem:[#allocation2 + $0x30] sm:$0xff] %vm447, 0.0
          %455 = vst.msk [vmem:[#allocation2 + $0x38] sm:$0xff] %vm447, 0.0
          %456 = vst.msk [vmem:[#allocation2 + $0x40] sm:$0xff] %vm447, 0.0
          %457 = vst.msk [vmem:[#allocation2 + $0x48] sm:$0xff] %vm447, 0.0
          %458 = vst.msk [vmem:[#allocation2 + $0x50] sm:$0xff] %vm447, 0.0
          %459 = vst.msk [vmem:[#allocation2 + $0x58] sm:$0xff] %vm447, 0.0
          %460 = vst.msk [vmem:[#allocation2 + $0x60] sm:$0xff] %vm447, 0.0
          %461 = vst.msk [vmem:[#allocation2 + $0x68] sm:$0xff] %vm447, 0.0
          %462 = vst.msk [vmem:[#allocation2 + $0x70] sm:$0xff] %vm447, 0.0
          %463 = vst.msk [vmem:[#allocation2 + $0x78] sm:$0xff] %vm447, 0.0
          %464 = vst.msk [vmem:[#allocation3] sm:$0xff] %vm447, 0.0
          %465 = vst.msk [vmem:[#allocation3 + $0x8] sm:$0xff] %vm447, 0.0
          %466 = vst.msk [vmem:[#allocation3 + $0x10] sm:$0xff] %vm447, 0.0
          %467 = vst.msk [vmem:[#allocation3 + $0x18] sm:$0xff] %vm447, 0.0
          %468 = vst.msk [vmem:[#allocation3 + $0x20] sm:$0xff] %vm447, 0.0
          %469 = vst.msk [vmem:[#allocation3 + $0x28] sm:$0xff] %vm447, 0.0
          %470 = vst.msk [vmem:[#allocation3 + $0x30] sm:$0xff] %vm447, 0.0
          %471 = vst.msk [vmem:[#allocation3 + $0x38] sm:$0xff] %vm447, 0.0
          %472 = vst.msk [vmem:[#allocation3 + $0x40] sm:$0xff] %vm447, 0.0
          %473 = vst.msk [vmem:[#allocation3 + $0x48] sm:$0xff] %vm447, 0.0
          %474 = vst.msk [vmem:[#allocation3 + $0x50] sm:$0xff] %vm447, 0.0
          %475 = vst.msk [vmem:[#allocation3 + $0x58] sm:$0xff] %vm447, 0.0
          %476 = vst.msk [vmem:[#allocation3 + $0x60] sm:$0xff] %vm447, 0.0
          %477 = vst.msk [vmem:[#allocation3 + $0x68] sm:$0xff] %vm447, 0.0
          %478 = vst.msk [vmem:[#allocation3 + $0x70] sm:$0xff] %vm447, 0.0
          %479 = vst.msk [vmem:[#allocation3 + $0x78] sm:$0xff] %vm447, 0.0
          %480 = vst.msk [vmem:[#allocation4] sm:$0xff] %vm447, 0.0
          %481 = vst.msk [vmem:[#allocation4 + $0x8] sm:$0xff] %vm447, 0.0
          %482 = vst.msk [vmem:[#allocation4 + $0x10] sm:$0xff] %vm447, 0.0
          %483 = vst.msk [vmem:[#allocation4 + $0x18] sm:$0xff] %vm447, 0.0
          %484 = vst.msk [vmem:[#allocation4 + $0x20] sm:$0xff] %vm447, 0.0
          %485 = vst.msk [vmem:[#allocation4 + $0x28] sm:$0xff] %vm447, 0.0
          %486 = vst.msk [vmem:[#allocation4 + $0x30] sm:$0xff] %vm447, 0.0
          %487 = vst.msk [vmem:[#allocation4 + $0x38] sm:$0xff] %vm447, 0.0
          %488 = vst.msk [vmem:[#allocation4 + $0x40] sm:$0xff] %vm447, 0.0
          %489 = vst.msk [vmem:[#allocation4 + $0x48] sm:$0xff] %vm447, 0.0
          %490 = vst.msk [vmem:[#allocation4 + $0x50] sm:$0xff] %vm447, 0.0
          %491 = vst.msk [vmem:[#allocation4 + $0x58] sm:$0xff] %vm447, 0.0
          %492 = vst.msk [vmem:[#allocation4 + $0x60] sm:$0xff] %vm447, 0.0
          %493 = vst.msk [vmem:[#allocation4 + $0x68] sm:$0xff] %vm447, 0.0
          %494 = vst.msk [vmem:[#allocation4 + $0x70] sm:$0xff] %vm447, 0.0
          %495 = vst.msk [vmem:[#allocation4 + $0x78] sm:$0xff] %vm447, 0.0
          %496 = vst.msk [vmem:[#allocation5] sm:$0xff] %vm447, 0.0
          %497 = vst.msk [vmem:[#allocation5 + $0x8] sm:$0xff] %vm447, 0.0
          %498 = vst.msk [vmem:[#allocation5 + $0x10] sm:$0xff] %vm447, 0.0
          %499 = vst.msk [vmem:[#allocation5 + $0x18] sm:$0xff] %vm447, 0.0
          %500 = vst.msk [vmem:[#allocation5 + $0x20] sm:$0xff] %vm447, 0.0
          %501 = vst.msk [vmem:[#allocation5 + $0x28] sm:$0xff] %vm447, 0.0
          %502 = vst.msk [vmem:[#allocation5 + $0x30] sm:$0xff] %vm447, 0.0
          %503 = vst.msk [vmem:[#allocation5 + $0x38] sm:$0xff] %vm447, 0.0
          %504 = vst.msk [vmem:[#allocation5 + $0x40] sm:$0xff] %vm447, 0.0
          %505 = vst.msk [vmem:[#allocation5 + $0x48] sm:$0xff] %vm447, 0.0
          %506 = vst.msk [vmem:[#allocation5 + $0x50] sm:$0xff] %vm447, 0.0
          %507 = vst.msk [vmem:[#allocation5 + $0x58] sm:$0xff] %vm447, 0.0
          %508 = vst.msk [vmem:[#allocation5 + $0x60] sm:$0xff] %vm447, 0.0
          %509 = vst.msk [vmem:[#allocation5 + $0x68] sm:$0xff] %vm447, 0.0
          %510 = vst.msk [vmem:[#allocation5 + $0x70] sm:$0xff] %vm447, 0.0
          %511 = vst.msk [vmem:[#allocation5 + $0x78] sm:$0xff] %vm447, 0.0
          %512 = vst.msk [vmem:[#allocation6] sm:$0xff] %vm447, 0.0
          %513 = vst.msk [vmem:[#allocation6 + $0x8] sm:$0xff] %vm447, 0.0
          %514 = vst.msk [vmem:[#allocation6 + $0x10] sm:$0xff] %vm447, 0.0
          %515 = vst.msk [vmem:[#allocation6 + $0x18] sm:$0xff] %vm447, 0.0
          %516 = vst.msk [vmem:[#allocation6 + $0x20] sm:$0xff] %vm447, 0.0
          %517 = vst.msk [vmem:[#allocation6 + $0x28] sm:$0xff] %vm447, 0.0
          %518 = vst.msk [vmem:[#allocation6 + $0x30] sm:$0xff] %vm447, 0.0
          %519 = vst.msk [vmem:[#allocation6 + $0x38] sm:$0xff] %vm447, 0.0
          %520 = vst.msk [vmem:[#allocation6 + $0x40] sm:$0xff] %vm447, 0.0
          %521 = vst.msk [vmem:[#allocation6 + $0x48] sm:$0xff] %vm447, 0.0
          %522 = vst.msk [vmem:[#allocation6 + $0x50] sm:$0xff] %vm447, 0.0
          %523 = vst.msk [vmem:[#allocation6 + $0x58] sm:$0xff] %vm447, 0.0
          %524 = vst.msk [vmem:[#allocation6 + $0x60] sm:$0xff] %vm447, 0.0
          %525 = vst.msk [vmem:[#allocation6 + $0x68] sm:$0xff] %vm447, 0.0
          %526 = vst.msk [vmem:[#allocation6 + $0x70] sm:$0xff] %vm447, 0.0
          %527 = vst.msk [vmem:[#allocation6 + $0x78] sm:$0xff] %vm447, 0.0
          %528 = vst.msk [vmem:[#allocation7] sm:$0xff] %vm447, 0.0
          %529 = vst.msk [vmem:[#allocation7 + $0x8] sm:$0xff] %vm447, 0.0
          %530 = vst.msk [vmem:[#allocation7 + $0x10] sm:$0xff] %vm447, 0.0
          %531 = vst.msk [vmem:[#allocation7 + $0x18] sm:$0xff] %vm447, 0.0
          %532 = vst.msk [vmem:[#allocation7 + $0x20] sm:$0xff] %vm447, 0.0
          %533 = vst.msk [vmem:[#allocation7 + $0x28] sm:$0xff] %vm447, 0.0
          %534 = vst.msk [vmem:[#allocation7 + $0x30] sm:$0xff] %vm447, 0.0
          %535 = vst.msk [vmem:[#allocation7 + $0x38] sm:$0xff] %vm447, 0.0
          %536 = vst.msk [vmem:[#allocation7 + $0x40] sm:$0xff] %vm447, 0.0
          %537 = vst.msk [vmem:[#allocation7 + $0x48] sm:$0xff] %vm447, 0.0
          %538 = vst.msk [vmem:[#allocation7 + $0x50] sm:$0xff] %vm447, 0.0
          %539 = vst.msk [vmem:[#allocation7 + $0x58] sm:$0xff] %vm447, 0.0
          %540 = vst.msk [vmem:[#allocation7 + $0x60] sm:$0xff] %vm447, 0.0
          %541 = vst.msk [vmem:[#allocation7 + $0x68] sm:$0xff] %vm447, 0.0
          %542 = vst.msk [vmem:[#allocation7 + $0x70] sm:$0xff] %vm447, 0.0
          %543 = vst.msk [vmem:[#allocation7 + $0x78] sm:$0xff] %vm447, 0.0
        $region36: #{tpu_custom_call.1} parent=31 // pred_fallthru
          _
        %v544 = vld [vmem:[%s419] sm:$0xff]
        %v545 = vld [vmem:[%s419 + $0x8] sm:$0xff]
        %v546 = vld [vmem:[%s419 + $0x10] sm:$0xff]
        %v547 = vld [vmem:[%s419 + $0x18] sm:$0xff]
        %v548 = vld [vmem:[%s419 + $0x20] sm:$0xff]
        %v549 = vld [vmem:[%s419 + $0x28] sm:$0xff]
        %v550 = vld [vmem:[%s419 + $0x30] sm:$0xff]
        %v551 = vld [vmem:[%s419 + $0x38] sm:$0xff]
        %v552 = vld [vmem:[%s419 + $0x40] sm:$0xff]
        %v553 = vld [vmem:[%s419 + $0x48] sm:$0xff]
        %v554 = vld [vmem:[%s419 + $0x50] sm:$0xff]
        %v555 = vld [vmem:[%s419 + $0x58] sm:$0xff]
        %v556 = vld [vmem:[%s419 + $0x60] sm:$0xff]
        %v557 = vld [vmem:[%s419 + $0x68] sm:$0xff]
        %v558 = vld [vmem:[%s419 + $0x70] sm:$0xff]
        %v559 = vld [vmem:[%s419 + $0x78] sm:$0xff]
        %v560 = vld [vmem:[%s429] sm:$0xff]
        %v561 = vld [vmem:[%s429 + $0x8] sm:$0xff]
        %v562 = vld [vmem:[%s429 + $0x10] sm:$0xff]
        %v563 = vld [vmem:[%s429 + $0x18] sm:$0xff]
        %v564 = vld [vmem:[%s429 + $0x20] sm:$0xff]
        %v565 = vld [vmem:[%s429 + $0x28] sm:$0xff]
        %v566 = vld [vmem:[%s429 + $0x30] sm:$0xff]
        %v567 = vld [vmem:[%s429 + $0x38] sm:$0xff]
        %v568 = vld [vmem:[%s429 + $0x40] sm:$0xff]
        %v569 = vld [vmem:[%s429 + $0x48] sm:$0xff]
        %v570 = vld [vmem:[%s429 + $0x50] sm:$0xff]
        %v571 = vld [vmem:[%s429 + $0x58] sm:$0xff]
        %v572 = vld [vmem:[%s429 + $0x60] sm:$0xff]
        %v573 = vld [vmem:[%s429 + $0x68] sm:$0xff]
        %v574 = vld [vmem:[%s429 + $0x70] sm:$0xff]
        %v575 = vld [vmem:[%s429 + $0x78] sm:$0xff]
        %v576 = vld [vmem:[%s439] sm:$0xff]
        %v577 = vld [vmem:[%s439 + $0x8] sm:$0xff]
        %v578 = vld [vmem:[%s439 + $0x10] sm:$0xff]
        %v579 = vld [vmem:[%s439 + $0x18] sm:$0xff]
        %v580 = vld [vmem:[%s439 + $0x20] sm:$0xff]
        %v581 = vld [vmem:[%s439 + $0x28] sm:$0xff]
        %v582 = vld [vmem:[%s439 + $0x30] sm:$0xff]
        %v583 = vld [vmem:[%s439 + $0x38] sm:$0xff]
        %v584 = vld [vmem:[%s439 + $0x40] sm:$0xff]
        %v585 = vld [vmem:[%s439 + $0x48] sm:$0xff]
        %v586 = vld [vmem:[%s439 + $0x50] sm:$0xff]
        %v587 = vld [vmem:[%s439 + $0x58] sm:$0xff]
        %v588 = vld [vmem:[%s439 + $0x60] sm:$0xff]
        %v589 = vld [vmem:[%s439 + $0x68] sm:$0xff]
        %v590 = vld [vmem:[%s439 + $0x70] sm:$0xff]
        %v591 = vld [vmem:[%s439 + $0x78] sm:$0xff]
        %593 = vset.pattern.permute.xlu0 0
        %594 = vperm.xlu0 %593, %v560
        %v595 = vpop.permute.xlu0 %594
        %598 = vset.pattern.permute.xlu0 0
        %599 = vperm.xlu0 %598, %v561
        %v600 = vpop.permute.xlu0 %599
        %603 = vset.pattern.permute.xlu0 0
        %604 = vperm.xlu0 %603, %v562
        %v605 = vpop.permute.xlu0 %604
        %608 = vset.pattern.permute.xlu0 0
        %609 = vperm.xlu0 %608, %v563
        %v610 = vpop.permute.xlu0 %609
        %613 = vset.pattern.permute.xlu0 0
        %614 = vperm.xlu0 %613, %v564
        %v615 = vpop.permute.xlu0 %614
        %618 = vset.pattern.permute.xlu0 0
        %619 = vperm.xlu0 %618, %v565
        %v620 = vpop.permute.xlu0 %619
        %623 = vset.pattern.permute.xlu0 0
        %624 = vperm.xlu0 %623, %v566
        %v625 = vpop.permute.xlu0 %624
        %628 = vset.pattern.permute.xlu0 0
        %629 = vperm.xlu0 %628, %v567
        %v630 = vpop.permute.xlu0 %629
        %633 = vset.pattern.permute.xlu0 0
        %634 = vperm.xlu0 %633, %v568
        %v635 = vpop.permute.xlu0 %634
        %638 = vset.pattern.permute.xlu0 0
        %639 = vperm.xlu0 %638, %v569
        %v640 = vpop.permute.xlu0 %639
        %643 = vset.pattern.permute.xlu0 0
        %644 = vperm.xlu0 %643, %v570
        %v645 = vpop.permute.xlu0 %644
        %648 = vset.pattern.permute.xlu0 0
        %649 = vperm.xlu0 %648, %v571
        %v650 = vpop.permute.xlu0 %649
        %653 = vset.pattern.permute.xlu0 0
        %654 = vperm.xlu0 %653, %v572
        %v655 = vpop.permute.xlu0 %654
        %658 = vset.pattern.permute.xlu0 0
        %659 = vperm.xlu0 %658, %v573
        %v660 = vpop.permute.xlu0 %659
        %663 = vset.pattern.permute.xlu0 0
        %664 = vperm.xlu0 %663, %v574
        %v665 = vpop.permute.xlu0 %664
        %668 = vset.pattern.permute.xlu0 0
        %669 = vperm.xlu0 %668, %v575
        %v670 = vpop.permute.xlu0 %669
        %v672 = vmul.f32 %v595, %v544
        %v673 = vmul.f32 %v600, %v545
        %v674 = vmul.f32 %v605, %v546
        %v675 = vmul.f32 %v610, %v547
        %v676 = vmul.f32 %v615, %v548
        %v677 = vmul.f32 %v620, %v549
        %v678 = vmul.f32 %v625, %v550
        %v679 = vmul.f32 %v630, %v551
        %v680 = vmul.f32 %v635, %v552
        %v681 = vmul.f32 %v640, %v553
        %v682 = vmul.f32 %v645, %v554
        %v683 = vmul.f32 %v650, %v555
        %v684 = vmul.f32 %v655, %v556
        %v685 = vmul.f32 %v660, %v557
        %v686 = vmul.f32 %v665, %v558
        %v687 = vmul.f32 %v670, %v559
        %688 = vset.pattern.permute.xlu0 1
        %689 = vperm.xlu0 %688, %v560
        %v690 = vpop.permute.xlu0 %689
        %692 = vset.pattern.permute.xlu0 1
        %693 = vperm.xlu0 %692, %v561
        %v694 = vpop.permute.xlu0 %693
        %696 = vset.pattern.permute.xlu0 1
        %697 = vperm.xlu0 %696, %v562
        %v698 = vpop.permute.xlu0 %697
        %700 = vset.pattern.permute.xlu0 1
        %701 = vperm.xlu0 %700, %v563
        %v702 = vpop.permute.xlu0 %701
        %704 = vset.pattern.permute.xlu0 1
        %705 = vperm.xlu0 %704, %v564
        %v706 = vpop.permute.xlu0 %705
        %708 = vset.pattern.permute.xlu0 1
        %709 = vperm.xlu0 %708, %v565
        %v710 = vpop.permute.xlu0 %709
        %712 = vset.pattern.permute.xlu0 1
        %713 = vperm.xlu0 %712, %v566
        %v714 = vpop.permute.xlu0 %713
        %716 = vset.pattern.permute.xlu0 1
        %717 = vperm.xlu0 %716, %v567
        %v718 = vpop.permute.xlu0 %717
        %720 = vset.pattern.permute.xlu0 1
        %721 = vperm.xlu0 %720, %v568
        %v722 = vpop.permute.xlu0 %721
        %724 = vset.pattern.permute.xlu0 1
        %725 = vperm.xlu0 %724, %v569
        %v726 = vpop.permute.xlu0 %725
        %728 = vset.pattern.permute.xlu0 1
        %729 = vperm.xlu0 %728, %v570
        %v730 = vpop.permute.xlu0 %729
        %732 = vset.pattern.permute.xlu0 1
        %733 = vperm.xlu0 %732, %v571
        %v734 = vpop.permute.xlu0 %733
        %736 = vset.pattern.permute.xlu0 1
        %737 = vperm.xlu0 %736, %v572
        %v738 = vpop.permute.xlu0 %737
        %740 = vset.pattern.permute.xlu0 1
        %741 = vperm.xlu0 %740, %v573
        %v742 = vpop.permute.xlu0 %741
        %744 = vset.pattern.permute.xlu0 1
        %745 = vperm.xlu0 %744, %v574
        %v746 = vpop.permute.xlu0 %745
        %748 = vset.pattern.permute.xlu0 1
        %749 = vperm.xlu0 %748, %v575
        %v750 = vpop.permute.xlu0 %749
        %v752 = vmul.f32 %v690, %v544
        %v753 = vmul.f32 %v694, %v545
        %v754 = vmul.f32 %v698, %v546
        %v755 = vmul.f32 %v702, %v547
        %v756 = vmul.f32 %v706, %v548
        %v757 = vmul.f32 %v710, %v549
        %v758 = vmul.f32 %v714, %v550
        %v759 = vmul.f32 %v718, %v551
        %v760 = vmul.f32 %v722, %v552
        %v761 = vmul.f32 %v726, %v553
        %v762 = vmul.f32 %v730, %v554
        %v763 = vmul.f32 %v734, %v555
        %v764 = vmul.f32 %v738, %v556
        %v765 = vmul.f32 %v742, %v557
        %v766 = vmul.f32 %v746, %v558
        %v767 = vmul.f32 %v750, %v559
        %784 = vrot.lane.b32.xlu0 %v752, 122
        %v785 = vpop.permute.xlu0 %784
        %786 = vrot.lane.b32.xlu0 %v753, 122
        %v787 = vpop.permute.xlu0 %786
        %788 = vrot.lane.b32.xlu0 %v754, 122
        %v789 = vpop.permute.xlu0 %788
        %790 = vrot.lane.b32.xlu0 %v755, 122
        %v791 = vpop.permute.xlu0 %790
        %792 = vrot.lane.b32.xlu0 %v756, 122
        %v793 = vpop.permute.xlu0 %792
        %794 = vrot.lane.b32.xlu0 %v757, 122
        %v795 = vpop.permute.xlu0 %794
        %796 = vrot.lane.b32.xlu0 %v758, 122
        %v797 = vpop.permute.xlu0 %796
        %798 = vrot.lane.b32.xlu0 %v759, 122
        %v799 = vpop.permute.xlu0 %798
        %800 = vrot.lane.b32.xlu0 %v760, 122
        %v801 = vpop.permute.xlu0 %800
        %802 = vrot.lane.b32.xlu0 %v761, 122
        %v803 = vpop.permute.xlu0 %802
        %804 = vrot.lane.b32.xlu0 %v762, 122
        %v805 = vpop.permute.xlu0 %804
        %806 = vrot.lane.b32.xlu0 %v763, 122
        %v807 = vpop.permute.xlu0 %806
        %808 = vrot.lane.b32.xlu0 %v764, 122
        %v809 = vpop.permute.xlu0 %808
        %810 = vrot.lane.b32.xlu0 %v765, 122
        %v811 = vpop.permute.xlu0 %810
        %812 = vrot.lane.b32.xlu0 %v766, 122
        %v813 = vpop.permute.xlu0 %812
        %814 = vrot.lane.b32.xlu0 %v767, 122
        %v815 = vpop.permute.xlu0 %814
        %v832 = vadd.f32 %v672, %v785
        %v833 = vadd.f32 %v673, %v787
        %v834 = vadd.f32 %v674, %v789
        %v835 = vadd.f32 %v675, %v791
        %v836 = vadd.f32 %v676, %v793
        %v837 = vadd.f32 %v677, %v795
        %v838 = vadd.f32 %v678, %v797
        %v839 = vadd.f32 %v679, %v799
        %v840 = vadd.f32 %v680, %v801
        %v841 = vadd.f32 %v681, %v803
        %v842 = vadd.f32 %v682, %v805
        %v843 = vadd.f32 %v683, %v807
        %v844 = vadd.f32 %v684, %v809
        %v845 = vadd.f32 %v685, %v811
        %v846 = vadd.f32 %v686, %v813
        %v847 = vadd.f32 %v687, %v815
        %848 = vset.pattern.permute.xlu0 2
        %849 = vperm.xlu0 %848, %v560
        %v850 = vpop.permute.xlu0 %849
        %852 = vset.pattern.permute.xlu0 2
        %853 = vperm.xlu0 %852, %v561
        %v854 = vpop.permute.xlu0 %853
        %856 = vset.pattern.permute.xlu0 2
        %857 = vperm.xlu0 %856, %v562
        %v858 = vpop.permute.xlu0 %857
        %860 = vset.pattern.permute.xlu0 2
        %861 = vperm.xlu0 %860, %v563
        %v862 = vpop.permute.xlu0 %861
        %864 = vset.pattern.permute.xlu0 2
        %865 = vperm.xlu0 %864, %v564
        %v866 = vpop.permute.xlu0 %865
        %868 = vset.pattern.permute.xlu0 2
        %869 = vperm.xlu0 %868, %v565
        %v870 = vpop.permute.xlu0 %869
        %872 = vset.pattern.permute.xlu0 2
        %873 = vperm.xlu0 %872, %v566
        %v874 = vpop.permute.xlu0 %873
        %876 = vset.pattern.permute.xlu0 2
        %877 = vperm.xlu0 %876, %v567
        %v878 = vpop.permute.xlu0 %877
        %880 = vset.pattern.permute.xlu0 2
        %881 = vperm.xlu0 %880, %v568
        %v882 = vpop.permute.xlu0 %881
        %884 = vset.pattern.permute.xlu0 2
        %885 = vperm.xlu0 %884, %v569
        %v886 = vpop.permute.xlu0 %885
        %888 = vset.pattern.permute.xlu0 2
        %889 = vperm.xlu0 %888, %v570
        %v890 = vpop.permute.xlu0 %889
        %892 = vset.pattern.permute.xlu0 2
        %893 = vperm.xlu0 %892, %v571
        %v894 = vpop.permute.xlu0 %893
        %896 = vset.pattern.permute.xlu0 2
        %897 = vperm.xlu0 %896, %v572
        %v898 = vpop.permute.xlu0 %897
        %900 = vset.pattern.permute.xlu0 2
        %901 = vperm.xlu0 %900, %v573
        %v902 = vpop.permute.xlu0 %901
        %904 = vset.pattern.permute.xlu0 2
        %905 = vperm.xlu0 %904, %v574
        %v906 = vpop.permute.xlu0 %905
        %908 = vset.pattern.permute.xlu0 2
        %909 = vperm.xlu0 %908, %v575
        %v910 = vpop.permute.xlu0 %909
        %v912 = vmul.f32 %v850, %v544
        %v913 = vmul.f32 %v854, %v545
        %v914 = vmul.f32 %v858, %v546
        %v915 = vmul.f32 %v862, %v547
        %v916 = vmul.f32 %v866, %v548
        %v917 = vmul.f32 %v870, %v549
        %v918 = vmul.f32 %v874, %v550
        %v919 = vmul.f32 %v878, %v551
        %v920 = vmul.f32 %v882, %v552
        %v921 = vmul.f32 %v886, %v553
        %v922 = vmul.f32 %v890, %v554
        %v923 = vmul.f32 %v894, %v555
        %v924 = vmul.f32 %v898, %v556
        %v925 = vmul.f32 %v902, %v557
        %v926 = vmul.f32 %v906, %v558
        %v927 = vmul.f32 %v910, %v559
        %944 = vrot.lane.b32.xlu0 %v912, 116
        %v945 = vpop.permute.xlu0 %944
        %946 = vrot.lane.b32.xlu0 %v913, 116
        %v947 = vpop.permute.xlu0 %946
        %948 = vrot.lane.b32.xlu0 %v914, 116
        %v949 = vpop.permute.xlu0 %948
        %950 = vrot.lane.b32.xlu0 %v915, 116
        %v951 = vpop.permute.xlu0 %950
        %952 = vrot.lane.b32.xlu0 %v916, 116
        %v953 = vpop.permute.xlu0 %952
        %954 = vrot.lane.b32.xlu0 %v917, 116
        %v955 = vpop.permute.xlu0 %954
        %956 = vrot.lane.b32.xlu0 %v918, 116
        %v957 = vpop.permute.xlu0 %956
        %958 = vrot.lane.b32.xlu0 %v919, 116
        %v959 = vpop.permute.xlu0 %958
        %960 = vrot.lane.b32.xlu0 %v920, 116
        %v961 = vpop.permute.xlu0 %960
        %962 = vrot.lane.b32.xlu0 %v921, 116
        %v963 = vpop.permute.xlu0 %962
        %964 = vrot.lane.b32.xlu0 %v922, 116
        %v965 = vpop.permute.xlu0 %964
        %966 = vrot.lane.b32.xlu0 %v923, 116
        %v967 = vpop.permute.xlu0 %966
        %968 = vrot.lane.b32.xlu0 %v924, 116
        %v969 = vpop.permute.xlu0 %968
        %970 = vrot.lane.b32.xlu0 %v925, 116
        %v971 = vpop.permute.xlu0 %970
        %972 = vrot.lane.b32.xlu0 %v926, 116
        %v973 = vpop.permute.xlu0 %972
        %974 = vrot.lane.b32.xlu0 %v927, 116
        %v975 = vpop.permute.xlu0 %974
        %v992 = vadd.f32 %v832, %v945
        %v993 = vadd.f32 %v833, %v947
        %v994 = vadd.f32 %v834, %v949
        %v995 = vadd.f32 %v835, %v951
        %v996 = vadd.f32 %v836, %v953
        %v997 = vadd.f32 %v837, %v955
        %v998 = vadd.f32 %v838, %v957
        %v999 = vadd.f32 %v839, %v959
        %v1000 = vadd.f32 %v840, %v961
        %v1001 = vadd.f32 %v841, %v963
        %v1002 = vadd.f32 %v842, %v965
        %v1003 = vadd.f32 %v843, %v967
        %v1004 = vadd.f32 %v844, %v969
        %v1005 = vadd.f32 %v845, %v971
        %v1006 = vadd.f32 %v846, %v973
        %v1007 = vadd.f32 %v847, %v975
        %vm1008 = vcmp.lt.f32.partialorder %v992, 0.0
        %vm1009 = vcmp.lt.f32.partialorder %v993, 0.0
        %vm1010 = vcmp.lt.f32.partialorder %v994, 0.0
        %vm1011 = vcmp.lt.f32.partialorder %v995, 0.0
        %vm1012 = vcmp.lt.f32.partialorder %v996, 0.0
        %vm1013 = vcmp.lt.f32.partialorder %v997, 0.0
        %vm1014 = vcmp.lt.f32.partialorder %v998, 0.0
        %vm1015 = vcmp.lt.f32.partialorder %v999, 0.0
        %vm1016 = vcmp.lt.f32.partialorder %v1000, 0.0
        %vm1017 = vcmp.lt.f32.partialorder %v1001, 0.0
        %vm1018 = vcmp.lt.f32.partialorder %v1002, 0.0
        %vm1019 = vcmp.lt.f32.partialorder %v1003, 0.0
        %vm1020 = vcmp.lt.f32.partialorder %v1004, 0.0
        %vm1021 = vcmp.lt.f32.partialorder %v1005, 0.0
        %vm1022 = vcmp.lt.f32.partialorder %v1006, 0.0
        %vm1023 = vcmp.lt.f32.partialorder %v1007, 0.0
        %v1024 = vmul.f32 %v992, 100.0
        %v1025 = vmul.f32 %v993, 100.0
        %v1026 = vmul.f32 %v994, 100.0
        %v1027 = vmul.f32 %v995, 100.0
        %v1028 = vmul.f32 %v996, 100.0
        %v1029 = vmul.f32 %v997, 100.0
        %v1030 = vmul.f32 %v998, 100.0
        %v1031 = vmul.f32 %v999, 100.0
        %v1032 = vmul.f32 %v1000, 100.0
        %v1033 = vmul.f32 %v1001, 100.0
        %v1034 = vmul.f32 %v1002, 100.0
        %v1035 = vmul.f32 %v1003, 100.0
        %v1036 = vmul.f32 %v1004, 100.0
        %v1037 = vmul.f32 %v1005, 100.0
        %v1038 = vmul.f32 %v1006, 100.0
        %v1039 = vmul.f32 %v1007, 100.0
        %v1040 = vsub.f32 1.0, %v1024
        %v1041 = vsub.f32 1.0, %v1025
        %v1042 = vsub.f32 1.0, %v1026
        %v1043 = vsub.f32 1.0, %v1027
        %v1044 = vsub.f32 1.0, %v1028
        %v1045 = vsub.f32 1.0, %v1029
        %v1046 = vsub.f32 1.0, %v1030
        %v1047 = vsub.f32 1.0, %v1031
        %v1048 = vsub.f32 1.0, %v1032
        %v1049 = vsub.f32 1.0, %v1033
        %v1050 = vsub.f32 1.0, %v1034
        %v1051 = vsub.f32 1.0, %v1035
        %v1052 = vsub.f32 1.0, %v1036
        %v1053 = vsub.f32 1.0, %v1037
        %v1054 = vsub.f32 1.0, %v1038
        %v1055 = vsub.f32 1.0, %v1039
        %v1056 = vmax.f32 %v992, 0.0
        %v1057 = vmax.f32 %v993, 0.0
        %v1058 = vmax.f32 %v994, 0.0
        %v1059 = vmax.f32 %v995, 0.0
        %v1060 = vmax.f32 %v996, 0.0
        %v1061 = vmax.f32 %v997, 0.0
        %v1062 = vmax.f32 %v998, 0.0
        %v1063 = vmax.f32 %v999, 0.0
        %v1064 = vmax.f32 %v1000, 0.0
        %v1065 = vmax.f32 %v1001, 0.0
        %v1066 = vmax.f32 %v1002, 0.0
        %v1067 = vmax.f32 %v1003, 0.0
        %v1068 = vmax.f32 %v1004, 0.0
        %v1069 = vmax.f32 %v1005, 0.0
        %v1070 = vmax.f32 %v1006, 0.0
        %v1071 = vmax.f32 %v1007, 0.0
        %v1072 = vmul.f32 %v1056, -10.0
        %v1073 = vmul.f32 %v1057, -10.0
        %v1074 = vmul.f32 %v1058, -10.0
        %v1075 = vmul.f32 %v1059, -10.0
        %v1076 = vmul.f32 %v1060, -10.0
        %v1077 = vmul.f32 %v1061, -10.0
        %v1078 = vmul.f32 %v1062, -10.0
        %v1079 = vmul.f32 %v1063, -10.0
        %v1080 = vmul.f32 %v1064, -10.0
        %v1081 = vmul.f32 %v1065, -10.0
        %v1082 = vmul.f32 %v1066, -10.0
        %v1083 = vmul.f32 %v1067, -10.0
        %v1084 = vmul.f32 %v1068, -10.0
        %v1085 = vmul.f32 %v1069, -10.0
        %v1086 = vmul.f32 %v1070, -10.0
        %v1087 = vmul.f32 %v1071, -10.0
        %v1088 = vmul.f32 %v1072, 1.442695
        %v1089 = vpow.pop %v1088
        %v1090 = vmul.f32 %v1073, 1.442695
        %v1091 = vpow.pop %v1090
        %v1092 = vmul.f32 %v1074, 1.442695
        %v1093 = vpow.pop %v1092
        %v1094 = vmul.f32 %v1075, 1.442695
        %v1095 = vpow.pop %v1094
        %v1096 = vmul.f32 %v1076, 1.442695
        %v1097 = vpow.pop %v1096
        %v1098 = vmul.f32 %v1077, 1.442695
        %v1099 = vpow.pop %v1098
        %v1100 = vmul.f32 %v1078, 1.442695
        %v1101 = vpow.pop %v1100
        %v1102 = vmul.f32 %v1079, 1.442695
        %v1103 = vpow.pop %v1102
        %v1104 = vmul.f32 %v1080, 1.442695
        %v1105 = vpow.pop %v1104
        %v1106 = vmul.f32 %v1081, 1.442695
        %v1107 = vpow.pop %v1106
        %v1108 = vmul.f32 %v1082, 1.442695
        %v1109 = vpow.pop %v1108
        %v1110 = vmul.f32 %v1083, 1.442695
        %v1111 = vpow.pop %v1110
        %v1112 = vmul.f32 %v1084, 1.442695
        %v1113 = vpow.pop %v1112
        %v1114 = vmul.f32 %v1085, 1.442695
        %v1115 = vpow.pop %v1114
        %v1116 = vmul.f32 %v1086, 1.442695
        %v1117 = vpow.pop %v1116
        %v1118 = vmul.f32 %v1087, 1.442695
        %v1119 = vpow.pop %v1118
        %v1120 = vsel %vm1008, %v1040, %v1089
        %v1121 = vsel %vm1009, %v1041, %v1091
        %v1122 = vsel %vm1010, %v1042, %v1093
        %v1123 = vsel %vm1011, %v1043, %v1095
        %v1124 = vsel %vm1012, %v1044, %v1097
        %v1125 = vsel %vm1013, %v1045, %v1099
        %v1126 = vsel %vm1014, %v1046, %v1101
        %v1127 = vsel %vm1015, %v1047, %v1103
        %v1128 = vsel %vm1016, %v1048, %v1105
        %v1129 = vsel %vm1017, %v1049, %v1107
        %v1130 = vsel %vm1018, %v1050, %v1109
        %v1131 = vsel %vm1019, %v1051, %v1111
        %v1132 = vsel %vm1020, %v1052, %v1113
        %v1133 = vsel %vm1021, %v1053, %v1115
        %v1134 = vsel %vm1022, %v1054, %v1117
        %v1135 = vsel %vm1023, %v1055, %v1119
        %s1136 = smul.u32 %s36, 2
        %s1137 = sadd.s32 %s1136, %s37
        %s1138 = smul.u32 %s1137, 128
        %v1139 = vlaneseq
        %v1140 = vshrl.u32 %v1139, 7
        %v1141 = vadd.s32 %v1140, 8
        %v1142 = vadd.s32 %v1140, 16
        %v1143 = vadd.s32 %v1140, 24
        %v1144 = vadd.s32 %v1140, 32
        %v1145 = vadd.s32 %v1140, 40
        %v1146 = vadd.s32 %v1140, 48
        %v1147 = vadd.s32 %v1140, 56
        %v1148 = vadd.s32 %v1140, 64
        %v1149 = vadd.s32 %v1140, 72
        %v1150 = vadd.s32 %v1140, 80
        %v1151 = vadd.s32 %v1140, 88
        %v1152 = vadd.s32 %v1140, 96
        %v1153 = vadd.s32 %v1140, 104
        %v1154 = vadd.s32 %v1140, 112
        %v1155 = vadd.s32 %v1140, 120
        %v1156 = vstv %s1138
        %v1157 = vadd.s32 %v1156, %v1140
        %v1158 = vadd.s32 %v1156, %v1141
        %v1159 = vadd.s32 %v1156, %v1142
        %v1160 = vadd.s32 %v1156, %v1143
        %v1161 = vadd.s32 %v1156, %v1144
        %v1162 = vadd.s32 %v1156, %v1145
        %v1163 = vadd.s32 %v1156, %v1146
        %v1164 = vadd.s32 %v1156, %v1147
        %v1165 = vadd.s32 %v1156, %v1148
        %v1166 = vadd.s32 %v1156, %v1149
        %v1167 = vadd.s32 %v1156, %v1150
        %v1168 = vadd.s32 %v1156, %v1151
        %v1169 = vadd.s32 %v1156, %v1152
        %v1170 = vadd.s32 %v1156, %v1153
        %v1171 = vadd.s32 %v1156, %v1154
        %v1172 = vadd.s32 %v1156, %v1155
        %vm1173 = vcmp.lt.s32.totalorder %v1157, 300
        %vm1174 = vcmp.lt.s32.totalorder %v1158, 300
        %vm1175 = vcmp.lt.s32.totalorder %v1159, 300
        %vm1176 = vcmp.lt.s32.totalorder %v1160, 300
        %vm1177 = vcmp.lt.s32.totalorder %v1161, 300
        %vm1178 = vcmp.lt.s32.totalorder %v1162, 300
        %vm1179 = vcmp.lt.s32.totalorder %v1163, 300
        %vm1180 = vcmp.lt.s32.totalorder %v1164, 300
        %vm1181 = vcmp.lt.s32.totalorder %v1165, 300
        %vm1182 = vcmp.lt.s32.totalorder %v1166, 300
        %vm1183 = vcmp.lt.s32.totalorder %v1167, 300
        %vm1184 = vcmp.lt.s32.totalorder %v1168, 300
        %vm1185 = vcmp.lt.s32.totalorder %v1169, 300
        %vm1186 = vcmp.lt.s32.totalorder %v1170, 300
        %vm1187 = vcmp.lt.s32.totalorder %v1171, 300
        %vm1188 = vcmp.lt.s32.totalorder %v1172, 300
        %v1189 = vsel %vm1173, 1, 0
        %v1190 = vsel %vm1174, 1, 0
        %v1191 = vsel %vm1175, 1, 0
        %v1192 = vsel %vm1176, 1, 0
        %v1193 = vsel %vm1177, 1, 0
        %v1194 = vsel %vm1178, 1, 0
        %v1195 = vsel %vm1179, 1, 0
        %v1196 = vsel %vm1180, 1, 0
        %v1197 = vsel %vm1181, 1, 0
        %v1198 = vsel %vm1182, 1, 0
        %v1199 = vsel %vm1183, 1, 0
        %v1200 = vsel %vm1184, 1, 0
        %v1201 = vsel %vm1185, 1, 0
        %v1202 = vsel %vm1186, 1, 0
        %v1203 = vsel %vm1187, 1, 0
        %v1204 = vsel %vm1188, 1, 0
        %vm1205 = vcmp.eq.s32.totalorder %v1189, 1
        %vm1206 = vcmp.eq.s32.totalorder %v1190, 1
        %vm1207 = vcmp.eq.s32.totalorder %v1191, 1
        %vm1208 = vcmp.eq.s32.totalorder %v1192, 1
        %vm1209 = vcmp.eq.s32.totalorder %v1193, 1
        %vm1210 = vcmp.eq.s32.totalorder %v1194, 1
        %vm1211 = vcmp.eq.s32.totalorder %v1195, 1
        %vm1212 = vcmp.eq.s32.totalorder %v1196, 1
        %vm1213 = vcmp.eq.s32.totalorder %v1197, 1
        %vm1214 = vcmp.eq.s32.totalorder %v1198, 1
        %vm1215 = vcmp.eq.s32.totalorder %v1199, 1
        %vm1216 = vcmp.eq.s32.totalorder %v1200, 1
        %vm1217 = vcmp.eq.s32.totalorder %v1201, 1
        %vm1218 = vcmp.eq.s32.totalorder %v1202, 1
        %vm1219 = vcmp.eq.s32.totalorder %v1203, 1
        %vm1220 = vcmp.eq.s32.totalorder %v1204, 1
        %v1221 = vsel %vm1205, %v1120, 0.0
        %v1222 = vsel %vm1206, %v1121, 0.0
        %v1223 = vsel %vm1207, %v1122, 0.0
        %v1224 = vsel %vm1208, %v1123, 0.0
        %v1225 = vsel %vm1209, %v1124, 0.0
        %v1226 = vsel %vm1210, %v1125, 0.0
        %v1227 = vsel %vm1211, %v1126, 0.0
        %v1228 = vsel %vm1212, %v1127, 0.0
        %v1229 = vsel %vm1213, %v1128, 0.0
        %v1230 = vsel %vm1214, %v1129, 0.0
        %v1231 = vsel %vm1215, %v1130, 0.0
        %v1232 = vsel %vm1216, %v1131, 0.0
        %v1233 = vsel %vm1217, %v1132, 0.0
        %v1234 = vsel %vm1218, %v1133, 0.0
        %v1235 = vsel %vm1219, %v1134, 0.0
        %v1236 = vsel %vm1220, %v1135, 0.0
        %v1237 = vld [vmem:[#allocation2] sm:$0xff]
        %v1238 = vld [vmem:[#allocation2 + $0x8] sm:$0xff]
        %v1239 = vld [vmem:[#allocation2 + $0x10] sm:$0xff]
        %v1240 = vld [vmem:[#allocation2 + $0x18] sm:$0xff]
        %v1241 = vld [vmem:[#allocation2 + $0x20] sm:$0xff]
        %v1242 = vld [vmem:[#allocation2 + $0x28] sm:$0xff]
        %v1243 = vld [vmem:[#allocation2 + $0x30] sm:$0xff]
        %v1244 = vld [vmem:[#allocation2 + $0x38] sm:$0xff]
        %v1245 = vld [vmem:[#allocation2 + $0x40] sm:$0xff]
        %v1246 = vld [vmem:[#allocation2 + $0x48] sm:$0xff]
        %v1247 = vld [vmem:[#allocation2 + $0x50] sm:$0xff]
        %v1248 = vld [vmem:[#allocation2 + $0x58] sm:$0xff]
        %v1249 = vld [vmem:[#allocation2 + $0x60] sm:$0xff]
        %v1250 = vld [vmem:[#allocation2 + $0x68] sm:$0xff]
        %v1251 = vld [vmem:[#allocation2 + $0x70] sm:$0xff]
        %v1252 = vld [vmem:[#allocation2 + $0x78] sm:$0xff]
        %v1253 = vmul.f32 %v992, %v576
        %v1254 = vmul.f32 %v993, %v577
        %v1255 = vmul.f32 %v994, %v578
        %v1256 = vmul.f32 %v995, %v579
        %v1257 = vmul.f32 %v996, %v580
        %v1258 = vmul.f32 %v997, %v581
        %v1259 = vmul.f32 %v998, %v582
        %v1260 = vmul.f32 %v999, %v583
        %v1261 = vmul.f32 %v1000, %v584
        %v1262 = vmul.f32 %v1001, %v585
        %v1263 = vmul.f32 %v1002, %v586
        %v1264 = vmul.f32 %v1003, %v587
        %v1265 = vmul.f32 %v1004, %v588
        %v1266 = vmul.f32 %v1005, %v589
        %v1267 = vmul.f32 %v1006, %v590
        %v1268 = vmul.f32 %v1007, %v591
        %v1269 = vadd.f32 %v1237, %v1253
        %v1270 = vadd.f32 %v1238, %v1254
        %v1271 = vadd.f32 %v1239, %v1255
        %v1272 = vadd.f32 %v1240, %v1256
        %v1273 = vadd.f32 %v1241, %v1257
        %v1274 = vadd.f32 %v1242, %v1258
        %v1275 = vadd.f32 %v1243, %v1259
        %v1276 = vadd.f32 %v1244, %v1260
        %v1277 = vadd.f32 %v1245, %v1261
        %v1278 = vadd.f32 %v1246, %v1262
        %v1279 = vadd.f32 %v1247, %v1263
        %v1280 = vadd.f32 %v1248, %v1264
        %v1281 = vadd.f32 %v1249, %v1265
        %v1282 = vadd.f32 %v1250, %v1266
        %v1283 = vadd.f32 %v1251, %v1267
        %v1284 = vadd.f32 %v1252, %v1268
        %vm1285 = vcmask 15360
        %1286 = vst.msk [vmem:[#allocation2] sm:$0xff] %vm1285, %v1269
        %1287 = vst.msk [vmem:[#allocation2 + $0x8] sm:$0xff] %vm1285, %v1270
        %1288 = vst.msk [vmem:[#allocation2 + $0x10] sm:$0xff] %vm1285, %v1271
        %1289 = vst.msk [vmem:[#allocation2 + $0x18] sm:$0xff] %vm1285, %v1272
        %1290 = vst.msk [vmem:[#allocation2 + $0x20] sm:$0xff] %vm1285, %v1273
        %1291 = vst.msk [vmem:[#allocation2 + $0x28] sm:$0xff] %vm1285, %v1274
        %1292 = vst.msk [vmem:[#allocation2 + $0x30] sm:$0xff] %vm1285, %v1275
        %1293 = vst.msk [vmem:[#allocation2 + $0x38] sm:$0xff] %vm1285, %v1276
        %1294 = vst.msk [vmem:[#allocation2 + $0x40] sm:$0xff] %vm1285, %v1277
        %1295 = vst.msk [vmem:[#allocation2 + $0x48] sm:$0xff] %vm1285, %v1278
        %1296 = vst.msk [vmem:[#allocation2 + $0x50] sm:$0xff] %vm1285, %v1279
        %1297 = vst.msk [vmem:[#allocation2 + $0x58] sm:$0xff] %vm1285, %v1280
        %1298 = vst.msk [vmem:[#allocation2 + $0x60] sm:$0xff] %vm1285, %v1281
        %1299 = vst.msk [vmem:[#allocation2 + $0x68] sm:$0xff] %vm1285, %v1282
        %1300 = vst.msk [vmem:[#allocation2 + $0x70] sm:$0xff] %vm1285, %v1283
        %1301 = vst.msk [vmem:[#allocation2 + $0x78] sm:$0xff] %vm1285, %v1284
        %v1302 = vld [vmem:[#allocation3] sm:$0xff]
        %v1303 = vld [vmem:[#allocation3 + $0x8] sm:$0xff]
        %v1304 = vld [vmem:[#allocation3 + $0x10] sm:$0xff]
        %v1305 = vld [vmem:[#allocation3 + $0x18] sm:$0xff]
        %v1306 = vld [vmem:[#allocation3 + $0x20] sm:$0xff]
        %v1307 = vld [vmem:[#allocation3 + $0x28] sm:$0xff]
        %v1308 = vld [vmem:[#allocation3 + $0x30] sm:$0xff]
        %v1309 = vld [vmem:[#allocation3 + $0x38] sm:$0xff]
        %v1310 = vld [vmem:[#allocation3 + $0x40] sm:$0xff]
        %v1311 = vld [vmem:[#allocation3 + $0x48] sm:$0xff]
        %v1312 = vld [vmem:[#allocation3 + $0x50] sm:$0xff]
        %v1313 = vld [vmem:[#allocation3 + $0x58] sm:$0xff]
        %v1314 = vld [vmem:[#allocation3 + $0x60] sm:$0xff]
        %v1315 = vld [vmem:[#allocation3 + $0x68] sm:$0xff]
        %v1316 = vld [vmem:[#allocation3 + $0x70] sm:$0xff]
        %v1317 = vld [vmem:[#allocation3 + $0x78] sm:$0xff]
        %1334 = vrot.lane.b32.xlu0 %v576, 4
        %v1335 = vpop.permute.xlu0 %1334
        %1336 = vrot.lane.b32.xlu0 %v577, 4
        %v1337 = vpop.permute.xlu0 %1336
        %1338 = vrot.lane.b32.xlu0 %v578, 4
        %v1339 = vpop.permute.xlu0 %1338
        %1340 = vrot.lane.b32.xlu0 %v579, 4
        %v1341 = vpop.permute.xlu0 %1340
        %1342 = vrot.lane.b32.xlu0 %v580, 4
        %v1343 = vpop.permute.xlu0 %1342
        %1344 = vrot.lane.b32.xlu0 %v581, 4
        %v1345 = vpop.permute.xlu0 %1344
        %1346 = vrot.lane.b32.xlu0 %v582, 4
        %v1347 = vpop.permute.xlu0 %1346
        %1348 = vrot.lane.b32.xlu0 %v583, 4
        %v1349 = vpop.permute.xlu0 %1348
        %1350 = vrot.lane.b32.xlu0 %v584, 4
        %v1351 = vpop.permute.xlu0 %1350
        %1352 = vrot.lane.b32.xlu0 %v585, 4
        %v1353 = vpop.permute.xlu0 %1352
        %1354 = vrot.lane.b32.xlu0 %v586, 4
        %v1355 = vpop.permute.xlu0 %1354
        %1356 = vrot.lane.b32.xlu0 %v587, 4
        %v1357 = vpop.permute.xlu0 %1356
        %1358 = vrot.lane.b32.xlu0 %v588, 4
        %v1359 = vpop.permute.xlu0 %1358
        %1360 = vrot.lane.b32.xlu0 %v589, 4
        %v1361 = vpop.permute.xlu0 %1360
        %1362 = vrot.lane.b32.xlu0 %v590, 4
        %v1363 = vpop.permute.xlu0 %1362
        %1364 = vrot.lane.b32.xlu0 %v591, 4
        %v1365 = vpop.permute.xlu0 %1364
        %v1382 = vmul.f32 %v992, %v1335
        %v1383 = vmul.f32 %v993, %v1337
        %v1384 = vmul.f32 %v994, %v1339
        %v1385 = vmul.f32 %v995, %v1341
        %v1386 = vmul.f32 %v996, %v1343
        %v1387 = vmul.f32 %v997, %v1345
        %v1388 = vmul.f32 %v998, %v1347
        %v1389 = vmul.f32 %v999, %v1349
        %v1390 = vmul.f32 %v1000, %v1351
        %v1391 = vmul.f32 %v1001, %v1353
        %v1392 = vmul.f32 %v1002, %v1355
        %v1393 = vmul.f32 %v1003, %v1357
        %v1394 = vmul.f32 %v1004, %v1359
        %v1395 = vmul.f32 %v1005, %v1361
        %v1396 = vmul.f32 %v1006, %v1363
        %v1397 = vmul.f32 %v1007, %v1365
        %1414 = vrot.lane.b32.xlu0 %v1382, 124
        %v1415 = vpop.permute.xlu0 %1414
        %1416 = vrot.lane.b32.xlu0 %v1383, 124
        %v1417 = vpop.permute.xlu0 %1416
        %1418 = vrot.lane.b32.xlu0 %v1384, 124
        %v1419 = vpop.permute.xlu0 %1418
        %1420 = vrot.lane.b32.xlu0 %v1385, 124
        %v1421 = vpop.permute.xlu0 %1420
        %1422 = vrot.lane.b32.xlu0 %v1386, 124
        %v1423 = vpop.permute.xlu0 %1422
        %1424 = vrot.lane.b32.xlu0 %v1387, 124
        %v1425 = vpop.permute.xlu0 %1424
        %1426 = vrot.lane.b32.xlu0 %v1388, 124
        %v1427 = vpop.permute.xlu0 %1426
        %1428 = vrot.lane.b32.xlu0 %v1389, 124
        %v1429 = vpop.permute.xlu0 %1428
        %1430 = vrot.lane.b32.xlu0 %v1390, 124
        %v1431 = vpop.permute.xlu0 %1430
        %1432 = vrot.lane.b32.xlu0 %v1391, 124
        %v1433 = vpop.permute.xlu0 %1432
        %1434 = vrot.lane.b32.xlu0 %v1392, 124
        %v1435 = vpop.permute.xlu0 %1434
        %1436 = vrot.lane.b32.xlu0 %v1393, 124
        %v1437 = vpop.permute.xlu0 %1436
        %1438 = vrot.lane.b32.xlu0 %v1394, 124
        %v1439 = vpop.permute.xlu0 %1438
        %1440 = vrot.lane.b32.xlu0 %v1395, 124
        %v1441 = vpop.permute.xlu0 %1440
        %1442 = vrot.lane.b32.xlu0 %v1396, 124
        %v1443 = vpop.permute.xlu0 %1442
        %1444 = vrot.lane.b32.xlu0 %v1397, 124
        %v1445 = vpop.permute.xlu0 %1444
        %v1462 = vadd.f32 %v1302, %v1415
        %v1463 = vadd.f32 %v1303, %v1417
        %v1464 = vadd.f32 %v1304, %v1419
        %v1465 = vadd.f32 %v1305, %v1421
        %v1466 = vadd.f32 %v1306, %v1423
        %v1467 = vadd.f32 %v1307, %v1425
        %v1468 = vadd.f32 %v1308, %v1427
        %v1469 = vadd.f32 %v1309, %v1429
        %v1470 = vadd.f32 %v1310, %v1431
        %v1471 = vadd.f32 %v1311, %v1433
        %v1472 = vadd.f32 %v1312, %v1435
        %v1473 = vadd.f32 %v1313, %v1437
        %v1474 = vadd.f32 %v1314, %v1439
        %v1475 = vadd.f32 %v1315, %v1441
        %v1476 = vadd.f32 %v1316, %v1443
        %v1477 = vadd.f32 %v1317, %v1445
        %1478 = vst.msk [vmem:[#allocation3] sm:$0xff] %vm1285, %v1462
        %1479 = vst.msk [vmem:[#allocation3 + $0x8] sm:$0xff] %vm1285, %v1463
        %1480 = vst.msk [vmem:[#allocation3 + $0x10] sm:$0xff] %vm1285, %v1464
        %1481 = vst.msk [vmem:[#allocation3 + $0x18] sm:$0xff] %vm1285, %v1465
        %1482 = vst.msk [vmem:[#allocation3 + $0x20] sm:$0xff] %vm1285, %v1466
        %1483 = vst.msk [vmem:[#allocation3 + $0x28] sm:$0xff] %vm1285, %v1467
        %1484 = vst.msk [vmem:[#allocation3 + $0x30] sm:$0xff] %vm1285, %v1468
        %1485 = vst.msk [vmem:[#allocation3 + $0x38] sm:$0xff] %vm1285, %v1469
        %1486 = vst.msk [vmem:[#allocation3 + $0x40] sm:$0xff] %vm1285, %v1470
        %1487 = vst.msk [vmem:[#allocation3 + $0x48] sm:$0xff] %vm1285, %v1471
        %1488 = vst.msk [vmem:[#allocation3 + $0x50] sm:$0xff] %vm1285, %v1472
        %1489 = vst.msk [vmem:[#allocation3 + $0x58] sm:$0xff] %vm1285, %v1473
        %1490 = vst.msk [vmem:[#allocation3 + $0x60] sm:$0xff] %vm1285, %v1474
        %1491 = vst.msk [vmem:[#allocation3 + $0x68] sm:$0xff] %vm1285, %v1475
        %1492 = vst.msk [vmem:[#allocation3 + $0x70] sm:$0xff] %vm1285, %v1476
        %1493 = vst.msk [vmem:[#allocation3 + $0x78] sm:$0xff] %vm1285, %v1477
        %v1494 = vld [vmem:[#allocation4] sm:$0xff]
        %v1495 = vld [vmem:[#allocation4 + $0x8] sm:$0xff]
        %v1496 = vld [vmem:[#allocation4 + $0x10] sm:$0xff]
        %v1497 = vld [vmem:[#allocation4 + $0x18] sm:$0xff]
        %v1498 = vld [vmem:[#allocation4 + $0x20] sm:$0xff]
        %v1499 = vld [vmem:[#allocation4 + $0x28] sm:$0xff]
        %v1500 = vld [vmem:[#allocation4 + $0x30] sm:$0xff]
        %v1501 = vld [vmem:[#allocation4 + $0x38] sm:$0xff]
        %v1502 = vld [vmem:[#allocation4 + $0x40] sm:$0xff]
        %v1503 = vld [vmem:[#allocation4 + $0x48] sm:$0xff]
        %v1504 = vld [vmem:[#allocation4 + $0x50] sm:$0xff]
        %v1505 = vld [vmem:[#allocation4 + $0x58] sm:$0xff]
        %v1506 = vld [vmem:[#allocation4 + $0x60] sm:$0xff]
        %v1507 = vld [vmem:[#allocation4 + $0x68] sm:$0xff]
        %v1508 = vld [vmem:[#allocation4 + $0x70] sm:$0xff]
        %v1509 = vld [vmem:[#allocation4 + $0x78] sm:$0xff]
        %1526 = vrot.lane.b32.xlu0 %v1221, 126
        %v1527 = vpop.permute.xlu0 %1526
        %1528 = vrot.lane.b32.xlu0 %v1222, 126
        %v1529 = vpop.permute.xlu0 %1528
        %1530 = vrot.lane.b32.xlu0 %v1223, 126
        %v1531 = vpop.permute.xlu0 %1530
        %1532 = vrot.lane.b32.xlu0 %v1224, 126
        %v1533 = vpop.permute.xlu0 %1532
        %1534 = vrot.lane.b32.xlu0 %v1225, 126
        %v1535 = vpop.permute.xlu0 %1534
        %1536 = vrot.lane.b32.xlu0 %v1226, 126
        %v1537 = vpop.permute.xlu0 %1536
        %1538 = vrot.lane.b32.xlu0 %v1227, 126
        %v1539 = vpop.permute.xlu0 %1538
        %1540 = vrot.lane.b32.xlu0 %v1228, 126
        %v1541 = vpop.permute.xlu0 %1540
        %1542 = vrot.lane.b32.xlu0 %v1229, 126
        %v1543 = vpop.permute.xlu0 %1542
        %1544 = vrot.lane.b32.xlu0 %v1230, 126
        %v1545 = vpop.permute.xlu0 %1544
        %1546 = vrot.lane.b32.xlu0 %v1231, 126
        %v1547 = vpop.permute.xlu0 %1546
        %1548 = vrot.lane.b32.xlu0 %v1232, 126
        %v1549 = vpop.permute.xlu0 %1548
        %1550 = vrot.lane.b32.xlu0 %v1233, 126
        %v1551 = vpop.permute.xlu0 %1550
        %1552 = vrot.lane.b32.xlu0 %v1234, 126
        %v1553 = vpop.permute.xlu0 %1552
        %1554 = vrot.lane.b32.xlu0 %v1235, 126
        %v1555 = vpop.permute.xlu0 %1554
        %1556 = vrot.lane.b32.xlu0 %v1236, 126
        %v1557 = vpop.permute.xlu0 %1556
        %v1574 = vmul.f32 %v992, %v1527
        %v1575 = vmul.f32 %v993, %v1529
        %v1576 = vmul.f32 %v994, %v1531
        %v1577 = vmul.f32 %v995, %v1533
        %v1578 = vmul.f32 %v996, %v1535
        %v1579 = vmul.f32 %v997, %v1537
        %v1580 = vmul.f32 %v998, %v1539
        %v1581 = vmul.f32 %v999, %v1541
        %v1582 = vmul.f32 %v1000, %v1543
        %v1583 = vmul.f32 %v1001, %v1545
        %v1584 = vmul.f32 %v1002, %v1547
        %v1585 = vmul.f32 %v1003, %v1549
        %v1586 = vmul.f32 %v1004, %v1551
        %v1587 = vmul.f32 %v1005, %v1553
        %v1588 = vmul.f32 %v1006, %v1555
        %v1589 = vmul.f32 %v1007, %v1557
        %v1590 = vadd.f32 %v1494, %v1574
        %v1591 = vadd.f32 %v1495, %v1575
        %v1592 = vadd.f32 %v1496, %v1576
        %v1593 = vadd.f32 %v1497, %v1577
        %v1594 = vadd.f32 %v1498, %v1578
        %v1595 = vadd.f32 %v1499, %v1579
        %v1596 = vadd.f32 %v1500, %v1580
        %v1597 = vadd.f32 %v1501, %v1581
        %v1598 = vadd.f32 %v1502, %v1582
        %v1599 = vadd.f32 %v1503, %v1583
        %v1600 = vadd.f32 %v1504, %v1584
        %v1601 = vadd.f32 %v1505, %v1585
        %v1602 = vadd.f32 %v1506, %v1586
        %v1603 = vadd.f32 %v1507, %v1587
        %v1604 = vadd.f32 %v1508, %v1588
        %v1605 = vadd.f32 %v1509, %v1589
        %1606 = vst.msk [vmem:[#allocation4] sm:$0xff] %vm1285, %v1590
        %1607 = vst.msk [vmem:[#allocation4 + $0x8] sm:$0xff] %vm1285, %v1591
        %1608 = vst.msk [vmem:[#allocation4 + $0x10] sm:$0xff] %vm1285, %v1592
        %1609 = vst.msk [vmem:[#allocation4 + $0x18] sm:$0xff] %vm1285, %v1593
        %1610 = vst.msk [vmem:[#allocation4 + $0x20] sm:$0xff] %vm1285, %v1594
        %1611 = vst.msk [vmem:[#allocation4 + $0x28] sm:$0xff] %vm1285, %v1595
        %1612 = vst.msk [vmem:[#allocation4 + $0x30] sm:$0xff] %vm1285, %v1596
        %1613 = vst.msk [vmem:[#allocation4 + $0x38] sm:$0xff] %vm1285, %v1597
        %1614 = vst.msk [vmem:[#allocation4 + $0x40] sm:$0xff] %vm1285, %v1598
        %1615 = vst.msk [vmem:[#allocation4 + $0x48] sm:$0xff] %vm1285, %v1599
        %1616 = vst.msk [vmem:[#allocation4 + $0x50] sm:$0xff] %vm1285, %v1600
        %1617 = vst.msk [vmem:[#allocation4 + $0x58] sm:$0xff] %vm1285, %v1601
        %1618 = vst.msk [vmem:[#allocation4 + $0x60] sm:$0xff] %vm1285, %v1602
        %1619 = vst.msk [vmem:[#allocation4 + $0x68] sm:$0xff] %vm1285, %v1603
        %1620 = vst.msk [vmem:[#allocation4 + $0x70] sm:$0xff] %vm1285, %v1604
        %1621 = vst.msk [vmem:[#allocation4 + $0x78] sm:$0xff] %vm1285, %v1605
        %v1622 = vld [vmem:[#allocation5] sm:$0xff]
        %v1623 = vld [vmem:[#allocation5 + $0x8] sm:$0xff]
        %v1624 = vld [vmem:[#allocation5 + $0x10] sm:$0xff]
        %v1625 = vld [vmem:[#allocation5 + $0x18] sm:$0xff]
        %v1626 = vld [vmem:[#allocation5 + $0x20] sm:$0xff]
        %v1627 = vld [vmem:[#allocation5 + $0x28] sm:$0xff]
        %v1628 = vld [vmem:[#allocation5 + $0x30] sm:$0xff]
        %v1629 = vld [vmem:[#allocation5 + $0x38] sm:$0xff]
        %v1630 = vld [vmem:[#allocation5 + $0x40] sm:$0xff]
        %v1631 = vld [vmem:[#allocation5 + $0x48] sm:$0xff]
        %v1632 = vld [vmem:[#allocation5 + $0x50] sm:$0xff]
        %v1633 = vld [vmem:[#allocation5 + $0x58] sm:$0xff]
        %v1634 = vld [vmem:[#allocation5 + $0x60] sm:$0xff]
        %v1635 = vld [vmem:[#allocation5 + $0x68] sm:$0xff]
        %v1636 = vld [vmem:[#allocation5 + $0x70] sm:$0xff]
        %v1637 = vld [vmem:[#allocation5 + $0x78] sm:$0xff]
        %1638 = vrot.lane.b32.xlu0 %v1221, 2
        %v1639 = vpop.permute.xlu0 %1638
        %1640 = vrot.lane.b32.xlu0 %v1222, 2
        %v1641 = vpop.permute.xlu0 %1640
        %1642 = vrot.lane.b32.xlu0 %v1223, 2
        %v1643 = vpop.permute.xlu0 %1642
        %1644 = vrot.lane.b32.xlu0 %v1224, 2
        %v1645 = vpop.permute.xlu0 %1644
        %1646 = vrot.lane.b32.xlu0 %v1225, 2
        %v1647 = vpop.permute.xlu0 %1646
        %1648 = vrot.lane.b32.xlu0 %v1226, 2
        %v1649 = vpop.permute.xlu0 %1648
        %1650 = vrot.lane.b32.xlu0 %v1227, 2
        %v1651 = vpop.permute.xlu0 %1650
        %1652 = vrot.lane.b32.xlu0 %v1228, 2
        %v1653 = vpop.permute.xlu0 %1652
        %1654 = vrot.lane.b32.xlu0 %v1229, 2
        %v1655 = vpop.permute.xlu0 %1654
        %1656 = vrot.lane.b32.xlu0 %v1230, 2
        %v1657 = vpop.permute.xlu0 %1656
        %1658 = vrot.lane.b32.xlu0 %v1231, 2
        %v1659 = vpop.permute.xlu0 %1658
        %1660 = vrot.lane.b32.xlu0 %v1232, 2
        %v1661 = vpop.permute.xlu0 %1660
        %1662 = vrot.lane.b32.xlu0 %v1233, 2
        %v1663 = vpop.permute.xlu0 %1662
        %1664 = vrot.lane.b32.xlu0 %v1234, 2
        %v1665 = vpop.permute.xlu0 %1664
        %1666 = vrot.lane.b32.xlu0 %v1235, 2
        %v1667 = vpop.permute.xlu0 %1666
        %1668 = vrot.lane.b32.xlu0 %v1236, 2
        %v1669 = vpop.permute.xlu0 %1668
        %v1686 = vmul.f32 %v992, %v1639
        %v1687 = vmul.f32 %v993, %v1641
        %v1688 = vmul.f32 %v994, %v1643
        %v1689 = vmul.f32 %v995, %v1645
        %v1690 = vmul.f32 %v996, %v1647
        %v1691 = vmul.f32 %v997, %v1649
        %v1692 = vmul.f32 %v998, %v1651
        %v1693 = vmul.f32 %v999, %v1653
        %v1694 = vmul.f32 %v1000, %v1655
        %v1695 = vmul.f32 %v1001, %v1657
        %v1696 = vmul.f32 %v1002, %v1659
        %v1697 = vmul.f32 %v1003, %v1661
        %v1698 = vmul.f32 %v1004, %v1663
        %v1699 = vmul.f32 %v1005, %v1665
        %v1700 = vmul.f32 %v1006, %v1667
        %v1701 = vmul.f32 %v1007, %v1669
        %1718 = vrot.lane.b32.xlu0 %v1686, 124
        %v1719 = vpop.permute.xlu0 %1718
        %1720 = vrot.lane.b32.xlu0 %v1687, 124
        %v1721 = vpop.permute.xlu0 %1720
        %1722 = vrot.lane.b32.xlu0 %v1688, 124
        %v1723 = vpop.permute.xlu0 %1722
        %1724 = vrot.lane.b32.xlu0 %v1689, 124
        %v1725 = vpop.permute.xlu0 %1724
        %1726 = vrot.lane.b32.xlu0 %v1690, 124
        %v1727 = vpop.permute.xlu0 %1726
        %1728 = vrot.lane.b32.xlu0 %v1691, 124
        %v1729 = vpop.permute.xlu0 %1728
        %1730 = vrot.lane.b32.xlu0 %v1692, 124
        %v1731 = vpop.permute.xlu0 %1730
        %1732 = vrot.lane.b32.xlu0 %v1693, 124
        %v1733 = vpop.permute.xlu0 %1732
        %1734 = vrot.lane.b32.xlu0 %v1694, 124
        %v1735 = vpop.permute.xlu0 %1734
        %1736 = vrot.lane.b32.xlu0 %v1695, 124
        %v1737 = vpop.permute.xlu0 %1736
        %1738 = vrot.lane.b32.xlu0 %v1696, 124
        %v1739 = vpop.permute.xlu0 %1738
        %1740 = vrot.lane.b32.xlu0 %v1697, 124
        %v1741 = vpop.permute.xlu0 %1740
        %1742 = vrot.lane.b32.xlu0 %v1698, 124
        %v1743 = vpop.permute.xlu0 %1742
        %1744 = vrot.lane.b32.xlu0 %v1699, 124
        %v1745 = vpop.permute.xlu0 %1744
        %1746 = vrot.lane.b32.xlu0 %v1700, 124
        %v1747 = vpop.permute.xlu0 %1746
        %1748 = vrot.lane.b32.xlu0 %v1701, 124
        %v1749 = vpop.permute.xlu0 %1748
        %v1766 = vadd.f32 %v1622, %v1719
        %v1767 = vadd.f32 %v1623, %v1721
        %v1768 = vadd.f32 %v1624, %v1723
        %v1769 = vadd.f32 %v1625, %v1725
        %v1770 = vadd.f32 %v1626, %v1727
        %v1771 = vadd.f32 %v1627, %v1729
        %v1772 = vadd.f32 %v1628, %v1731
        %v1773 = vadd.f32 %v1629, %v1733
        %v1774 = vadd.f32 %v1630, %v1735
        %v1775 = vadd.f32 %v1631, %v1737
        %v1776 = vadd.f32 %v1632, %v1739
        %v1777 = vadd.f32 %v1633, %v1741
        %v1778 = vadd.f32 %v1634, %v1743
        %v1779 = vadd.f32 %v1635, %v1745
        %v1780 = vadd.f32 %v1636, %v1747
        %v1781 = vadd.f32 %v1637, %v1749
        %1782 = vst.msk [vmem:[#allocation5] sm:$0xff] %vm1285, %v1766
        %1783 = vst.msk [vmem:[#allocation5 + $0x8] sm:$0xff] %vm1285, %v1767
        %1784 = vst.msk [vmem:[#allocation5 + $0x10] sm:$0xff] %vm1285, %v1768
        %1785 = vst.msk [vmem:[#allocation5 + $0x18] sm:$0xff] %vm1285, %v1769
        %1786 = vst.msk [vmem:[#allocation5 + $0x20] sm:$0xff] %vm1285, %v1770
        %1787 = vst.msk [vmem:[#allocation5 + $0x28] sm:$0xff] %vm1285, %v1771
        %1788 = vst.msk [vmem:[#allocation5 + $0x30] sm:$0xff] %vm1285, %v1772
        %1789 = vst.msk [vmem:[#allocation5 + $0x38] sm:$0xff] %vm1285, %v1773
        %1790 = vst.msk [vmem:[#allocation5 + $0x40] sm:$0xff] %vm1285, %v1774
        %1791 = vst.msk [vmem:[#allocation5 + $0x48] sm:$0xff] %vm1285, %v1775
        %1792 = vst.msk [vmem:[#allocation5 + $0x50] sm:$0xff] %vm1285, %v1776
        %1793 = vst.msk [vmem:[#allocation5 + $0x58] sm:$0xff] %vm1285, %v1777
        %1794 = vst.msk [vmem:[#allocation5 + $0x60] sm:$0xff] %vm1285, %v1778
        %1795 = vst.msk [vmem:[#allocation5 + $0x68] sm:$0xff] %vm1285, %v1779
        %1796 = vst.msk [vmem:[#allocation5 + $0x70] sm:$0xff] %vm1285, %v1780
        %1797 = vst.msk [vmem:[#allocation5 + $0x78] sm:$0xff] %vm1285, %v1781
        %v1798 = vld [vmem:[#allocation6] sm:$0xff]
        %v1799 = vld [vmem:[#allocation6 + $0x8] sm:$0xff]
        %v1800 = vld [vmem:[#allocation6 + $0x10] sm:$0xff]
        %v1801 = vld [vmem:[#allocation6 + $0x18] sm:$0xff]
        %v1802 = vld [vmem:[#allocation6 + $0x20] sm:$0xff]
        %v1803 = vld [vmem:[#allocation6 + $0x28] sm:$0xff]
        %v1804 = vld [vmem:[#allocation6 + $0x30] sm:$0xff]
        %v1805 = vld [vmem:[#allocation6 + $0x38] sm:$0xff]
        %v1806 = vld [vmem:[#allocation6 + $0x40] sm:$0xff]
        %v1807 = vld [vmem:[#allocation6 + $0x48] sm:$0xff]
        %v1808 = vld [vmem:[#allocation6 + $0x50] sm:$0xff]
        %v1809 = vld [vmem:[#allocation6 + $0x58] sm:$0xff]
        %v1810 = vld [vmem:[#allocation6 + $0x60] sm:$0xff]
        %v1811 = vld [vmem:[#allocation6 + $0x68] sm:$0xff]
        %v1812 = vld [vmem:[#allocation6 + $0x70] sm:$0xff]
        %v1813 = vld [vmem:[#allocation6 + $0x78] sm:$0xff]
        %v1814 = vadd.f32 %v1798, %v576
        %v1815 = vadd.f32 %v1799, %v577
        %v1816 = vadd.f32 %v1800, %v578
        %v1817 = vadd.f32 %v1801, %v579
        %v1818 = vadd.f32 %v1802, %v580
        %v1819 = vadd.f32 %v1803, %v581
        %v1820 = vadd.f32 %v1804, %v582
        %v1821 = vadd.f32 %v1805, %v583
        %v1822 = vadd.f32 %v1806, %v584
        %v1823 = vadd.f32 %v1807, %v585
        %v1824 = vadd.f32 %v1808, %v586
        %v1825 = vadd.f32 %v1809, %v587
        %v1826 = vadd.f32 %v1810, %v588
        %v1827 = vadd.f32 %v1811, %v589
        %v1828 = vadd.f32 %v1812, %v590
        %v1829 = vadd.f32 %v1813, %v591
        %1830 = vst.msk [vmem:[#allocation6] sm:$0xff] %vm1285, %v1814
        %1831 = vst.msk [vmem:[#allocation6 + $0x8] sm:$0xff] %vm1285, %v1815
        %1832 = vst.msk [vmem:[#allocation6 + $0x10] sm:$0xff] %vm1285, %v1816
        %1833 = vst.msk [vmem:[#allocation6 + $0x18] sm:$0xff] %vm1285, %v1817
        %1834 = vst.msk [vmem:[#allocation6 + $0x20] sm:$0xff] %vm1285, %v1818
        %1835 = vst.msk [vmem:[#allocation6 + $0x28] sm:$0xff] %vm1285, %v1819
        %1836 = vst.msk [vmem:[#allocation6 + $0x30] sm:$0xff] %vm1285, %v1820
        %1837 = vst.msk [vmem:[#allocation6 + $0x38] sm:$0xff] %vm1285, %v1821
        %1838 = vst.msk [vmem:[#allocation6 + $0x40] sm:$0xff] %vm1285, %v1822
        %1839 = vst.msk [vmem:[#allocation6 + $0x48] sm:$0xff] %vm1285, %v1823
        %1840 = vst.msk [vmem:[#allocation6 + $0x50] sm:$0xff] %vm1285, %v1824
        %1841 = vst.msk [vmem:[#allocation6 + $0x58] sm:$0xff] %vm1285, %v1825
        %1842 = vst.msk [vmem:[#allocation6 + $0x60] sm:$0xff] %vm1285, %v1826
        %1843 = vst.msk [vmem:[#allocation6 + $0x68] sm:$0xff] %vm1285, %v1827
        %1844 = vst.msk [vmem:[#allocation6 + $0x70] sm:$0xff] %vm1285, %v1828
        %1845 = vst.msk [vmem:[#allocation6 + $0x78] sm:$0xff] %vm1285, %v1829
        %v1846 = vld [vmem:[#allocation7] sm:$0xff]
        %v1847 = vld [vmem:[#allocation7 + $0x8] sm:$0xff]
        %v1848 = vld [vmem:[#allocation7 + $0x10] sm:$0xff]
        %v1849 = vld [vmem:[#allocation7 + $0x18] sm:$0xff]
        %v1850 = vld [vmem:[#allocation7 + $0x20] sm:$0xff]
        %v1851 = vld [vmem:[#allocation7 + $0x28] sm:$0xff]
        %v1852 = vld [vmem:[#allocation7 + $0x30] sm:$0xff]
        %v1853 = vld [vmem:[#allocation7 + $0x38] sm:$0xff]
        %v1854 = vld [vmem:[#allocation7 + $0x40] sm:$0xff]
        %v1855 = vld [vmem:[#allocation7 + $0x48] sm:$0xff]
        %v1856 = vld [vmem:[#allocation7 + $0x50] sm:$0xff]
        %v1857 = vld [vmem:[#allocation7 + $0x58] sm:$0xff]
        %v1858 = vld [vmem:[#allocation7 + $0x60] sm:$0xff]
        %v1859 = vld [vmem:[#allocation7 + $0x68] sm:$0xff]
        %v1860 = vld [vmem:[#allocation7 + $0x70] sm:$0xff]
        %v1861 = vld [vmem:[#allocation7 + $0x78] sm:$0xff]
        %v1862 = vadd.f32 %v1846, %v1527
        %v1863 = vadd.f32 %v1847, %v1529
        %v1864 = vadd.f32 %v1848, %v1531
        %v1865 = vadd.f32 %v1849, %v1533
        %v1866 = vadd.f32 %v1850, %v1535
        %v1867 = vadd.f32 %v1851, %v1537
        %v1868 = vadd.f32 %v1852, %v1539
        %v1869 = vadd.f32 %v1853, %v1541
        %v1870 = vadd.f32 %v1854, %v1543
        %v1871 = vadd.f32 %v1855, %v1545
        %v1872 = vadd.f32 %v1856, %v1547
        %v1873 = vadd.f32 %v1857, %v1549
        %v1874 = vadd.f32 %v1858, %v1551
        %v1875 = vadd.f32 %v1859, %v1553
        %v1876 = vadd.f32 %v1860, %v1555
        %v1877 = vadd.f32 %v1861, %v1557
        %1878 = vst.msk [vmem:[#allocation7] sm:$0xff] %vm1285, %v1862
        %1879 = vst.msk [vmem:[#allocation7 + $0x8] sm:$0xff] %vm1285, %v1863
        %1880 = vst.msk [vmem:[#allocation7 + $0x10] sm:$0xff] %vm1285, %v1864
        %1881 = vst.msk [vmem:[#allocation7 + $0x18] sm:$0xff] %vm1285, %v1865
        %1882 = vst.msk [vmem:[#allocation7 + $0x20] sm:$0xff] %vm1285, %v1866
        %1883 = vst.msk [vmem:[#allocation7 + $0x28] sm:$0xff] %vm1285, %v1867
        %1884 = vst.msk [vmem:[#allocation7 + $0x30] sm:$0xff] %vm1285, %v1868
        %1885 = vst.msk [vmem:[#allocation7 + $0x38] sm:$0xff] %vm1285, %v1869
        %1886 = vst.msk [vmem:[#allocation7 + $0x40] sm:$0xff] %vm1285, %v1870
        %1887 = vst.msk [vmem:[#allocation7 + $0x48] sm:$0xff] %vm1285, %v1871
        %1888 = vst.msk [vmem:[#allocation7 + $0x50] sm:$0xff] %vm1285, %v1872
        %1889 = vst.msk [vmem:[#allocation7 + $0x58] sm:$0xff] %vm1285, %v1873
        %1890 = vst.msk [vmem:[#allocation7 + $0x60] sm:$0xff] %vm1285, %v1874
        %1891 = vst.msk [vmem:[#allocation7 + $0x68] sm:$0xff] %vm1285, %v1875
        %1892 = vst.msk [vmem:[#allocation7 + $0x70] sm:$0xff] %vm1285, %v1876
        %1893 = vst.msk [vmem:[#allocation7 + $0x78] sm:$0xff] %vm1285, %v1877
        %p1894 = scmp.eq.s32.totalorder %s37, 1
        // Predicated region
        $region37: #{tpu_custom_call.1} parent=31 // pred_check
          %p1895 = pneg %p1894
        $region38: #{tpu_custom_call.1} parent=31 // pred_check_branch
          %1897 = sbr.rel (%p1895) target = $region40
        $region39: #{tpu_custom_call.1} parent=31 // pred_region
          %v1898 = vld [vmem:[#allocation2] sm:$0xff]
          %v1899 = vld [vmem:[#allocation2 + $0x8] sm:$0xff]
          %v1900 = vld [vmem:[#allocation2 + $0x10] sm:$0xff]
          %v1901 = vld [vmem:[#allocation2 + $0x18] sm:$0xff]
          %v1902 = vld [vmem:[#allocation2 + $0x20] sm:$0xff]
          %v1903 = vld [vmem:[#allocation2 + $0x28] sm:$0xff]
          %v1904 = vld [vmem:[#allocation2 + $0x30] sm:$0xff]
          %v1905 = vld [vmem:[#allocation2 + $0x38] sm:$0xff]
          %v1906 = vld [vmem:[#allocation2 + $0x40] sm:$0xff]
          %v1907 = vld [vmem:[#allocation2 + $0x48] sm:$0xff]
          %v1908 = vld [vmem:[#allocation2 + $0x50] sm:$0xff]
          %v1909 = vld [vmem:[#allocation2 + $0x58] sm:$0xff]
          %v1910 = vld [vmem:[#allocation2 + $0x60] sm:$0xff]
          %v1911 = vld [vmem:[#allocation2 + $0x68] sm:$0xff]
          %v1912 = vld [vmem:[#allocation2 + $0x70] sm:$0xff]
          %v1913 = vld [vmem:[#allocation2 + $0x78] sm:$0xff]
          %v1914 = vsel %vm1285, %v1898, 0.0
          %v1915 = vsel %vm1285, %v1899, 0.0
          %v1916 = vadd.f32 %v1914, %v1915
          %v1917 = vsel %vm1285, %v1900, 0.0
          %v1918 = vadd.f32 %v1916, %v1917
          %v1919 = vsel %vm1285, %v1901, 0.0
          %v1920 = vadd.f32 %v1918, %v1919
          %v1921 = vsel %vm1285, %v1902, 0.0
          %v1922 = vadd.f32 %v1920, %v1921
          %v1923 = vsel %vm1285, %v1903, 0.0
          %v1924 = vadd.f32 %v1922, %v1923
          %v1925 = vsel %vm1285, %v1904, 0.0
          %v1926 = vadd.f32 %v1924, %v1925
          %v1927 = vsel %vm1285, %v1905, 0.0
          %v1928 = vadd.f32 %v1926, %v1927
          %v1929 = vsel %vm1285, %v1906, 0.0
          %v1930 = vadd.f32 %v1928, %v1929
          %v1931 = vsel %vm1285, %v1907, 0.0
          %v1932 = vadd.f32 %v1930, %v1931
          %v1933 = vsel %vm1285, %v1908, 0.0
          %v1934 = vadd.f32 %v1932, %v1933
          %v1935 = vsel %vm1285, %v1909, 0.0
          %v1936 = vadd.f32 %v1934, %v1935
          %v1937 = vsel %vm1285, %v1910, 0.0
          %v1938 = vadd.f32 %v1936, %v1937
          %v1939 = vsel %vm1285, %v1911, 0.0
          %v1940 = vadd.f32 %v1938, %v1939
          %v1941 = vsel %vm1285, %v1912, 0.0
          %v1942 = vadd.f32 %v1940, %v1941
          %v1943 = vsel %vm1285, %v1913, 0.0
          %v1944 = vadd.f32 %v1942, %v1943
          %v1945 = vrot.slane %v1944, 4
          %v1946 = vadd.f32 %v1944, %v1945
          %v1947 = vrot.slane %v1946, 2
          %v1948 = vadd.f32 %v1946, %v1947
          %v1949 = vrot.slane %v1948, 1
          %v1950 = vadd.f32 %v1948, %v1949
          %vm1951 = vcmask 8192
          %1952 = vst.msk [vmem:[%s382] sm:$0x1] %vm1951, %v1950
          %v1953 = vld [vmem:[#allocation3] sm:$0xff]
          %v1954 = vld [vmem:[#allocation3 + $0x8] sm:$0xff]
          %v1955 = vld [vmem:[#allocation3 + $0x10] sm:$0xff]
          %v1956 = vld [vmem:[#allocation3 + $0x18] sm:$0xff]
          %v1957 = vld [vmem:[#allocation3 + $0x20] sm:$0xff]
          %v1958 = vld [vmem:[#allocation3 + $0x28] sm:$0xff]
          %v1959 = vld [vmem:[#allocation3 + $0x30] sm:$0xff]
          %v1960 = vld [vmem:[#allocation3 + $0x38] sm:$0xff]
          %v1961 = vld [vmem:[#allocation3 + $0x40] sm:$0xff]
          %v1962 = vld [vmem:[#allocation3 + $0x48] sm:$0xff]
          %v1963 = vld [vmem:[#allocation3 + $0x50] sm:$0xff]
          %v1964 = vld [vmem:[#allocation3 + $0x58] sm:$0xff]
          %v1965 = vld [vmem:[#allocation3 + $0x60] sm:$0xff]
          %v1966 = vld [vmem:[#allocation3 + $0x68] sm:$0xff]
          %v1967 = vld [vmem:[#allocation3 + $0x70] sm:$0xff]
          %v1968 = vld [vmem:[#allocation3 + $0x78] sm:$0xff]
          %v1969 = vsel %vm1285, %v1953, 0.0
          %v1970 = vsel %vm1285, %v1954, 0.0
          %v1971 = vadd.f32 %v1969, %v1970
          %v1972 = vsel %vm1285, %v1955, 0.0
          %v1973 = vadd.f32 %v1971, %v1972
          %v1974 = vsel %vm1285, %v1956, 0.0
          %v1975 = vadd.f32 %v1973, %v1974
          %v1976 = vsel %vm1285, %v1957, 0.0
          %v1977 = vadd.f32 %v1975, %v1976
          %v1978 = vsel %vm1285, %v1958, 0.0
          %v1979 = vadd.f32 %v1977, %v1978
          %v1980 = vsel %vm1285, %v1959, 0.0
          %v1981 = vadd.f32 %v1979, %v1980
          %v1982 = vsel %vm1285, %v1960, 0.0
          %v1983 = vadd.f32 %v1981, %v1982
          %v1984 = vsel %vm1285, %v1961, 0.0
          %v1985 = vadd.f32 %v1983, %v1984
          %v1986 = vsel %vm1285, %v1962, 0.0
          %v1987 = vadd.f32 %v1985, %v1986
          %v1988 = vsel %vm1285, %v1963, 0.0
          %v1989 = vadd.f32 %v1987, %v1988
          %v1990 = vsel %vm1285, %v1964, 0.0
          %v1991 = vadd.f32 %v1989, %v1990
          %v1992 = vsel %vm1285, %v1965, 0.0
          %v1993 = vadd.f32 %v1991, %v1992
          %v1994 = vsel %vm1285, %v1966, 0.0
          %v1995 = vadd.f32 %v1993, %v1994
          %v1996 = vsel %vm1285, %v1967, 0.0
          %v1997 = vadd.f32 %v1995, %v1996
          %v1998 = vsel %vm1285, %v1968, 0.0
          %v1999 = vadd.f32 %v1997, %v1998
          %v2000 = vrot.slane %v1999, 4
          %v2001 = vadd.f32 %v1999, %v2000
          %v2002 = vrot.slane %v2001, 2
          %v2003 = vadd.f32 %v2001, %v2002
          %v2004 = vrot.slane %v2003, 1
          %v2005 = vadd.f32 %v2003, %v2004
          %2006 = vst.msk [vmem:[%s388] sm:$0x1] %vm1951, %v2005
          %v2007 = vld [vmem:[#allocation4] sm:$0xff]
          %v2008 = vld [vmem:[#allocation4 + $0x8] sm:$0xff]
          %v2009 = vld [vmem:[#allocation4 + $0x10] sm:$0xff]
          %v2010 = vld [vmem:[#allocation4 + $0x18] sm:$0xff]
          %v2011 = vld [vmem:[#allocation4 + $0x20] sm:$0xff]
          %v2012 = vld [vmem:[#allocation4 + $0x28] sm:$0xff]
          %v2013 = vld [vmem:[#allocation4 + $0x30] sm:$0xff]
          %v2014 = vld [vmem:[#allocation4 + $0x38] sm:$0xff]
          %v2015 = vld [vmem:[#allocation4 + $0x40] sm:$0xff]
          %v2016 = vld [vmem:[#allocation4 + $0x48] sm:$0xff]
          %v2017 = vld [vmem:[#allocation4 + $0x50] sm:$0xff]
          %v2018 = vld [vmem:[#allocation4 + $0x58] sm:$0xff]
          %v2019 = vld [vmem:[#allocation4 + $0x60] sm:$0xff]
          %v2020 = vld [vmem:[#allocation4 + $0x68] sm:$0xff]
          %v2021 = vld [vmem:[#allocation4 + $0x70] sm:$0xff]
          %v2022 = vld [vmem:[#allocation4 + $0x78] sm:$0xff]
          %v2023 = vsel %vm1285, %v2007, 0.0
          %v2024 = vsel %vm1285, %v2008, 0.0
          %v2025 = vadd.f32 %v2023, %v2024
          %v2026 = vsel %vm1285, %v2009, 0.0
          %v2027 = vadd.f32 %v2025, %v2026
          %v2028 = vsel %vm1285, %v2010, 0.0
          %v2029 = vadd.f32 %v2027, %v2028
          %v2030 = vsel %vm1285, %v2011, 0.0
          %v2031 = vadd.f32 %v2029, %v2030
          %v2032 = vsel %vm1285, %v2012, 0.0
          %v2033 = vadd.f32 %v2031, %v2032
          %v2034 = vsel %vm1285, %v2013, 0.0
          %v2035 = vadd.f32 %v2033, %v2034
          %v2036 = vsel %vm1285, %v2014, 0.0
          %v2037 = vadd.f32 %v2035, %v2036
          %v2038 = vsel %vm1285, %v2015, 0.0
          %v2039 = vadd.f32 %v2037, %v2038
          %v2040 = vsel %vm1285, %v2016, 0.0
          %v2041 = vadd.f32 %v2039, %v2040
          %v2042 = vsel %vm1285, %v2017, 0.0
          %v2043 = vadd.f32 %v2041, %v2042
          %v2044 = vsel %vm1285, %v2018, 0.0
          %v2045 = vadd.f32 %v2043, %v2044
          %v2046 = vsel %vm1285, %v2019, 0.0
          %v2047 = vadd.f32 %v2045, %v2046
          %v2048 = vsel %vm1285, %v2020, 0.0
          %v2049 = vadd.f32 %v2047, %v2048
          %v2050 = vsel %vm1285, %v2021, 0.0
          %v2051 = vadd.f32 %v2049, %v2050
          %v2052 = vsel %vm1285, %v2022, 0.0
          %v2053 = vadd.f32 %v2051, %v2052
          %v2054 = vrot.slane %v2053, 4
          %v2055 = vadd.f32 %v2053, %v2054
          %v2056 = vrot.slane %v2055, 2
          %v2057 = vadd.f32 %v2055, %v2056
          %v2058 = vrot.slane %v2057, 1
          %v2059 = vadd.f32 %v2057, %v2058
          %2060 = vst.msk [vmem:[%s394] sm:$0x1] %vm1951, %v2059
          %v2061 = vld [vmem:[#allocation5] sm:$0xff]
          %v2062 = vld [vmem:[#allocation5 + $0x8] sm:$0xff]
          %v2063 = vld [vmem:[#allocation5 + $0x10] sm:$0xff]
          %v2064 = vld [vmem:[#allocation5 + $0x18] sm:$0xff]
          %v2065 = vld [vmem:[#allocation5 + $0x20] sm:$0xff]
          %v2066 = vld [vmem:[#allocation5 + $0x28] sm:$0xff]
          %v2067 = vld [vmem:[#allocation5 + $0x30] sm:$0xff]
          %v2068 = vld [vmem:[#allocation5 + $0x38] sm:$0xff]
          %v2069 = vld [vmem:[#allocation5 + $0x40] sm:$0xff]
          %v2070 = vld [vmem:[#allocation5 + $0x48] sm:$0xff]
          %v2071 = vld [vmem:[#allocation5 + $0x50] sm:$0xff]
          %v2072 = vld [vmem:[#allocation5 + $0x58] sm:$0xff]
          %v2073 = vld [vmem:[#allocation5 + $0x60] sm:$0xff]
          %v2074 = vld [vmem:[#allocation5 + $0x68] sm:$0xff]
          %v2075 = vld [vmem:[#allocation5 + $0x70] sm:$0xff]
          %v2076 = vld [vmem:[#allocation5 + $0x78] sm:$0xff]
          %v2077 = vsel %vm1285, %v2061, 0.0
          %v2078 = vsel %vm1285, %v2062, 0.0
          %v2079 = vadd.f32 %v2077, %v2078
          %v2080 = vsel %vm1285, %v2063, 0.0
          %v2081 = vadd.f32 %v2079, %v2080
          %v2082 = vsel %vm1285, %v2064, 0.0
          %v2083 = vadd.f32 %v2081, %v2082
          %v2084 = vsel %vm1285, %v2065, 0.0
          %v2085 = vadd.f32 %v2083, %v2084
          %v2086 = vsel %vm1285, %v2066, 0.0
          %v2087 = vadd.f32 %v2085, %v2086
          %v2088 = vsel %vm1285, %v2067, 0.0
          %v2089 = vadd.f32 %v2087, %v2088
          %v2090 = vsel %vm1285, %v2068, 0.0
          %v2091 = vadd.f32 %v2089, %v2090
          %v2092 = vsel %vm1285, %v2069, 0.0
          %v2093 = vadd.f32 %v2091, %v2092
          %v2094 = vsel %vm1285, %v2070, 0.0
          %v2095 = vadd.f32 %v2093, %v2094
          %v2096 = vsel %vm1285, %v2071, 0.0
          %v2097 = vadd.f32 %v2095, %v2096
          %v2098 = vsel %vm1285, %v2072, 0.0
          %v2099 = vadd.f32 %v2097, %v2098
          %v2100 = vsel %vm1285, %v2073, 0.0
          %v2101 = vadd.f32 %v2099, %v2100
          %v2102 = vsel %vm1285, %v2074, 0.0
          %v2103 = vadd.f32 %v2101, %v2102
          %v2104 = vsel %vm1285, %v2075, 0.0
          %v2105 = vadd.f32 %v2103, %v2104
          %v2106 = vsel %vm1285, %v2076, 0.0
          %v2107 = vadd.f32 %v2105, %v2106
          %v2108 = vrot.slane %v2107, 4
          %v2109 = vadd.f32 %v2107, %v2108
          %v2110 = vrot.slane %v2109, 2
          %v2111 = vadd.f32 %v2109, %v2110
          %v2112 = vrot.slane %v2111, 1
          %v2113 = vadd.f32 %v2111, %v2112
          %2114 = vst.msk [vmem:[%s400] sm:$0x1] %vm1951, %v2113
          %v2115 = vld [vmem:[#allocation6] sm:$0xff]
          %v2116 = vld [vmem:[#allocation6 + $0x8] sm:$0xff]
          %v2117 = vld [vmem:[#allocation6 + $0x10] sm:$0xff]
          %v2118 = vld [vmem:[#allocation6 + $0x18] sm:$0xff]
          %v2119 = vld [vmem:[#allocation6 + $0x20] sm:$0xff]
          %v2120 = vld [vmem:[#allocation6 + $0x28] sm:$0xff]
          %v2121 = vld [vmem:[#allocation6 + $0x30] sm:$0xff]
          %v2122 = vld [vmem:[#allocation6 + $0x38] sm:$0xff]
          %v2123 = vld [vmem:[#allocation6 + $0x40] sm:$0xff]
          %v2124 = vld [vmem:[#allocation6 + $0x48] sm:$0xff]
          %v2125 = vld [vmem:[#allocation6 + $0x50] sm:$0xff]
          %v2126 = vld [vmem:[#allocation6 + $0x58] sm:$0xff]
          %v2127 = vld [vmem:[#allocation6 + $0x60] sm:$0xff]
          %v2128 = vld [vmem:[#allocation6 + $0x68] sm:$0xff]
          %v2129 = vld [vmem:[#allocation6 + $0x70] sm:$0xff]
          %v2130 = vld [vmem:[#allocation6 + $0x78] sm:$0xff]
          %v2131 = vsel %vm1285, %v2115, 0.0
          %v2132 = vsel %vm1285, %v2116, 0.0
          %v2133 = vadd.f32 %v2131, %v2132
          %v2134 = vsel %vm1285, %v2117, 0.0
          %v2135 = vadd.f32 %v2133, %v2134
          %v2136 = vsel %vm1285, %v2118, 0.0
          %v2137 = vadd.f32 %v2135, %v2136
          %v2138 = vsel %vm1285, %v2119, 0.0
          %v2139 = vadd.f32 %v2137, %v2138
          %v2140 = vsel %vm1285, %v2120, 0.0
          %v2141 = vadd.f32 %v2139, %v2140
          %v2142 = vsel %vm1285, %v2121, 0.0
          %v2143 = vadd.f32 %v2141, %v2142
          %v2144 = vsel %vm1285, %v2122, 0.0
          %v2145 = vadd.f32 %v2143, %v2144
          %v2146 = vsel %vm1285, %v2123, 0.0
          %v2147 = vadd.f32 %v2145, %v2146
          %v2148 = vsel %vm1285, %v2124, 0.0
          %v2149 = vadd.f32 %v2147, %v2148
          %v2150 = vsel %vm1285, %v2125, 0.0
          %v2151 = vadd.f32 %v2149, %v2150
          %v2152 = vsel %vm1285, %v2126, 0.0
          %v2153 = vadd.f32 %v2151, %v2152
          %v2154 = vsel %vm1285, %v2127, 0.0
          %v2155 = vadd.f32 %v2153, %v2154
          %v2156 = vsel %vm1285, %v2128, 0.0
          %v2157 = vadd.f32 %v2155, %v2156
          %v2158 = vsel %vm1285, %v2129, 0.0
          %v2159 = vadd.f32 %v2157, %v2158
          %v2160 = vsel %vm1285, %v2130, 0.0
          %v2161 = vadd.f32 %v2159, %v2160
          %v2162 = vrot.slane %v2161, 4
          %v2163 = vadd.f32 %v2161, %v2162
          %v2164 = vrot.slane %v2163, 2
          %v2165 = vadd.f32 %v2163, %v2164
          %v2166 = vrot.slane %v2165, 1
          %v2167 = vadd.f32 %v2165, %v2166
          %2168 = vst.msk [vmem:[%s406] sm:$0x1] %vm1951, %v2167
          %v2169 = vld [vmem:[#allocation7] sm:$0xff]
          %v2170 = vld [vmem:[#allocation7 + $0x8] sm:$0xff]
          %v2171 = vld [vmem:[#allocation7 + $0x10] sm:$0xff]
          %v2172 = vld [vmem:[#allocation7 + $0x18] sm:$0xff]
          %v2173 = vld [vmem:[#allocation7 + $0x20] sm:$0xff]
          %v2174 = vld [vmem:[#allocation7 + $0x28] sm:$0xff]
          %v2175 = vld [vmem:[#allocation7 + $0x30] sm:$0xff]
          %v2176 = vld [vmem:[#allocation7 + $0x38] sm:$0xff]
          %v2177 = vld [vmem:[#allocation7 + $0x40] sm:$0xff]
          %v2178 = vld [vmem:[#allocation7 + $0x48] sm:$0xff]
          %v2179 = vld [vmem:[#allocation7 + $0x50] sm:$0xff]
          %v2180 = vld [vmem:[#allocation7 + $0x58] sm:$0xff]
          %v2181 = vld [vmem:[#allocation7 + $0x60] sm:$0xff]
          %v2182 = vld [vmem:[#allocation7 + $0x68] sm:$0xff]
          %v2183 = vld [vmem:[#allocation7 + $0x70] sm:$0xff]
          %v2184 = vld [vmem:[#allocation7 + $0x78] sm:$0xff]
          %v2185 = vsel %vm1285, %v2169, 0.0
          %v2186 = vsel %vm1285, %v2170, 0.0
          %v2187 = vadd.f32 %v2185, %v2186
          %v2188 = vsel %vm1285, %v2171, 0.0
          %v2189 = vadd.f32 %v2187, %v2188
          %v2190 = vsel %vm1285, %v2172, 0.0
          %v2191 = vadd.f32 %v2189, %v2190
          %v2192 = vsel %vm1285, %v2173, 0.0
          %v2193 = vadd.f32 %v2191, %v2192
          %v2194 = vsel %vm1285, %v2174, 0.0
          %v2195 = vadd.f32 %v2193, %v2194
          %v2196 = vsel %vm1285, %v2175, 0.0
          %v2197 = vadd.f32 %v2195, %v2196
          %v2198 = vsel %vm1285, %v2176, 0.0
          %v2199 = vadd.f32 %v2197, %v2198
          %v2200 = vsel %vm1285, %v2177, 0.0
          %v2201 = vadd.f32 %v2199, %v2200
          %v2202 = vsel %vm1285, %v2178, 0.0
          %v2203 = vadd.f32 %v2201, %v2202
          %v2204 = vsel %vm1285, %v2179, 0.0
          %v2205 = vadd.f32 %v2203, %v2204
          %v2206 = vsel %vm1285, %v2180, 0.0
          %v2207 = vadd.f32 %v2205, %v2206
          %v2208 = vsel %vm1285, %v2181, 0.0
          %v2209 = vadd.f32 %v2207, %v2208
          %v2210 = vsel %vm1285, %v2182, 0.0
          %v2211 = vadd.f32 %v2209, %v2210
          %v2212 = vsel %vm1285, %v2183, 0.0
          %v2213 = vadd.f32 %v2211, %v2212
          %v2214 = vsel %vm1285, %v2184, 0.0
          %v2215 = vadd.f32 %v2213, %v2214
          %v2216 = vrot.slane %v2215, 4
          %v2217 = vadd.f32 %v2215, %v2216
          %v2218 = vrot.slane %v2217, 2
          %v2219 = vadd.f32 %v2217, %v2218
          %v2220 = vrot.slane %v2219, 1
          %v2221 = vadd.f32 %v2219, %v2220
          %2222 = vst.msk [vmem:[%s412] sm:$0x1] %vm1951, %v2221
        $region40: #{tpu_custom_call.1} parent=31 // pred_fallthru
          _
        %s2223 = sand.u32 %s142, 1
        %s2224 = scalar_lea.sflag [#allocation9], %s2223
        %s2225 = sand.u32 %s142, 1
        %s2226 = scalar_lea.vmem [#allocation8], %s2225
        %s2227 = sand.u32 %s32, 1
        %s2228 = scalar_lea.sflag [#allocation11], %s2227
        %s2229 = sand.u32 %s168, 1
        %s2230 = scalar_lea.vmem [#allocation10], %s2229
        %s2231 = sand.u32 %s32, 1
        %s2232 = scalar_lea.sflag [#allocation11], %s2231
        %s2233 = sand.u32 %s194, 1
        %s2234 = scalar_lea.vmem [#allocation12], %s2233
        %s2235 = sand.u32 %s32, 1
        %s2236 = scalar_lea.sflag [#allocation14], %s2235
        %s2237 = sand.u32 %s220, 1
        %s2238 = scalar_lea.vmem [#allocation13], %s2237
        %s2239 = sand.u32 %s32, 1
        %s2240 = scalar_lea.sflag [#allocation14], %s2239
        %s2241 = sand.u32 %s246, 1
        %s2242 = scalar_lea.vmem [#allocation15], %s2241
        %s2243 = sand.u32 %s272, 1
        %s2244 = scalar_lea.sflag [#allocation17], %s2243
        %s2245 = sand.u32 %s272, 1
        %s2246 = scalar_lea.vmem [#allocation16], %s2245
        // Predicated region
        $region41: #{tpu_custom_call.1} parent=31 // pred_check
          %p2247 = pneg %p152
        $region42: #{tpu_custom_call.1} parent=31 // pred_check_branch
          %2249 = sbr.rel (%p2247) target = $region44
        $region43: #{tpu_custom_call.1} parent=31 // pred_region
          %s2251 = ssub.s32 16, 16
          %2252 = vsyncadd %s2224, %s2251
          %s2253 = smul.addr %s36, 16
          %s2254 = scalar_lea.hbm %s3, %s2253
          %s2256 = sshll.u32 %s2226, 4
          %s2257 = int_to_ptr.vmem [resolvable:$true] %s2256
          %2259 = dma.vmem_to_hbm [thread:$0]  %s2257, 16, %s2254, %s2224
        $region44: #{tpu_custom_call.1} parent=31 // pred_fallthru
          _
        // Predicated region
        $region45: #{tpu_custom_call.1} parent=31 // pred_check
          %p2260 = pneg %p178
        $region46: #{tpu_custom_call.1} parent=31 // pred_check_branch
          %2262 = sbr.rel (%p2260) target = $region48
        $region47: #{tpu_custom_call.1} parent=31 // pred_region
          %s2264 = ssub.s32 16, 16
          %2265 = vsyncadd %s2228, %s2264
          %s2266 = smul.addr %s36, 16
          %s2267 = scalar_lea.hbm %s4, %s2266
          %s2269 = sshll.u32 %s2230, 4
          %s2270 = int_to_ptr.vmem [resolvable:$true] %s2269
          %2272 = dma.vmem_to_hbm [thread:$0]  %s2270, 16, %s2267, %s2228
        $region48: #{tpu_custom_call.1} parent=31 // pred_fallthru
          _
        // Predicated region
        $region49: #{tpu_custom_call.1} parent=31 // pred_check
          %p2273 = pneg %p204
        $region50: #{tpu_custom_call.1} parent=31 // pred_check_branch
          %2275 = sbr.rel (%p2273) target = $region52
        $region51: #{tpu_custom_call.1} parent=31 // pred_region
          %s2277 = ssub.s32 16, 16
          %2278 = vsyncadd %s2232, %s2277
          %s2279 = smul.addr %s36, 16
          %s2280 = scalar_lea.hbm %s5, %s2279
          %s2282 = sshll.u32 %s2234, 4
          %s2283 = int_to_ptr.vmem [resolvable:$true] %s2282
          %2285 = dma.vmem_to_hbm [thread:$0]  %s2283, 16, %s2280, %s2232
        $region52: #{tpu_custom_call.1} parent=31 // pred_fallthru
          _
        // Predicated region
        $region53: #{tpu_custom_call.1} parent=31 // pred_check
          %p2286 = pneg %p230
        $region54: #{tpu_custom_call.1} parent=31 // pred_check_branch
          %2288 = sbr.rel (%p2286) target = $region56
        $region55: #{tpu_custom_call.1} parent=31 // pred_region
          %s2290 = ssub.s32 16, 16
          %2291 = vsyncadd %s2236, %s2290
          %s2292 = smul.addr %s36, 16
          %s2293 = scalar_lea.hbm %s6, %s2292
          %s2295 = sshll.u32 %s2238, 4
          %s2296 = int_to_ptr.vmem [resolvable:$true] %s2295
          %2298 = dma.vmem_to_hbm [thread:$0]  %s2296, 16, %s2293, %s2236
        $region56: #{tpu_custom_call.1} parent=31 // pred_fallthru
          _
        // Predicated region
        $region57: #{tpu_custom_call.1} parent=31 // pred_check
          %p2299 = pneg %p256
        $region58: #{tpu_custom_call.1} parent=31 // pred_check_branch
          %2301 = sbr.rel (%p2299) target = $region60
        $region59: #{tpu_custom_call.1} parent=31 // pred_region
          %s2303 = ssub.s32 16, 16
          %2304 = vsyncadd %s2240, %s2303
          %s2305 = smul.addr %s36, 16
          %s2306 = scalar_lea.hbm %s7, %s2305
          %s2308 = sshll.u32 %s2242, 4
          %s2309 = int_to_ptr.vmem [resolvable:$true] %s2308
          %2311 = dma.vmem_to_hbm [thread:$0]  %s2309, 16, %s2306, %s2240
        $region60: #{tpu_custom_call.1} parent=31 // pred_fallthru
          _
        // Predicated region
        $region61: #{tpu_custom_call.1} parent=31 // pred_check
          %p2312 = pneg %p282
        $region62: #{tpu_custom_call.1} parent=31 // pred_check_branch
          %2314 = sbr.rel (%p2312) target = $region64
        $region63: #{tpu_custom_call.1} parent=31 // pred_region
          %s2316 = ssub.s32 16, 16
          %2317 = vsyncadd %s2244, %s2316
          %s2318 = smul.addr %s36, 16
          %s2319 = scalar_lea.hbm %s8, %s2318
          %s2321 = sshll.u32 %s2246, 4
          %s2322 = int_to_ptr.vmem [resolvable:$true] %s2321
          %2324 = dma.vmem_to_hbm [thread:$0]  %s2322, 16, %s2319, %s2244
        $region64: #{tpu_custom_call.1} parent=31 // pred_fallthru
          _
      $region32: #{tpu_custom_call.1} parent=5 // pred_fallthru
        _
      %p2325 = scmp.le.s32.totalorder 2, %s27
      // Predicated region
      $region65: #{tpu_custom_call.1} parent=5 // pred_check
        %p2326 = pneg %p2325
      $region66: #{tpu_custom_call.1} parent=5 // pred_check_branch
        %2328 = sbr.rel (%p2326) target = $region68
      $region67: #{tpu_custom_call.1} parent=5 // pred_region
        %s2329 = ssub.s32 %s27, 2
        // Predicated region
        $region69: #{tpu_custom_call.1} parent=67 // pred_check
          %p2330 = pneg %p158
        $region70: #{tpu_custom_call.1} parent=67 // pred_check_branch
          %2332 = sbr.rel (%p2330) target = $region72
        $region71: #{tpu_custom_call.1} parent=67 // pred_region
          %s2333 = sand.u32 %s143, 1
          %s2334 = scalar_lea.sflag [#allocation9], %s2333
          %s2335 = sand.u32 %s143, 1
          %s2336 = scalar_lea.vmem [#allocation8], %s2335
          %2337 = dma.done %s2334, 16
        $region72: #{tpu_custom_call.1} parent=67 // pred_fallthru
          _
        // Predicated region
        $region73: #{tpu_custom_call.1} parent=67 // pred_check
          %p2338 = pneg %p184
        $region74: #{tpu_custom_call.1} parent=67 // pred_check_branch
          %2340 = sbr.rel (%p2338) target = $region76
        $region75: #{tpu_custom_call.1} parent=67 // pred_region
          %s2341 = sand.u32 %s33, 1
          %s2342 = scalar_lea.sflag [#allocation11], %s2341
          %s2343 = sand.u32 %s169, 1
          %s2344 = scalar_lea.vmem [#allocation10], %s2343
          %2345 = dma.done %s2342, 16
        $region76: #{tpu_custom_call.1} parent=67 // pred_fallthru
          _
        // Predicated region
        $region77: #{tpu_custom_call.1} parent=67 // pred_check
          %p2346 = pneg %p210
        $region78: #{tpu_custom_call.1} parent=67 // pred_check_branch
          %2348 = sbr.rel (%p2346) target = $region80
        $region79: #{tpu_custom_call.1} parent=67 // pred_region
          %s2349 = sand.u32 %s33, 1
          %s2350 = scalar_lea.sflag [#allocation11], %s2349
          %s2351 = sand.u32 %s195, 1
          %s2352 = scalar_lea.vmem [#allocation12], %s2351
          %2353 = dma.done %s2350, 16
        $region80: #{tpu_custom_call.1} parent=67 // pred_fallthru
          _
        // Predicated region
        $region81: #{tpu_custom_call.1} parent=67 // pred_check
          %p2354 = pneg %p236
        $region82: #{tpu_custom_call.1} parent=67 // pred_check_branch
          %2356 = sbr.rel (%p2354) target = $region84
        $region83: #{tpu_custom_call.1} parent=67 // pred_region
          %s2357 = sand.u32 %s33, 1
          %s2358 = scalar_lea.sflag [#allocation14], %s2357
          %s2359 = sand.u32 %s221, 1
          %s2360 = scalar_lea.vmem [#allocation13], %s2359
          %2361 = dma.done %s2358, 16
        $region84: #{tpu_custom_call.1} parent=67 // pred_fallthru
          _
        // Predicated region
        $region85: #{tpu_custom_call.1} parent=67 // pred_check
          %p2362 = pneg %p262
        $region86: #{tpu_custom_call.1} parent=67 // pred_check_branch
          %2364 = sbr.rel (%p2362) target = $region88
        $region87: #{tpu_custom_call.1} parent=67 // pred_region
          %s2365 = sand.u32 %s33, 1
          %s2366 = scalar_lea.sflag [#allocation14], %s2365
          %s2367 = sand.u32 %s247, 1
          %s2368 = scalar_lea.vmem [#allocation15], %s2367
          %2369 = dma.done %s2366, 16
        $region88: #{tpu_custom_call.1} parent=67 // pred_fallthru
          _
        // Predicated region
        $region89: #{tpu_custom_call.1} parent=67 // pred_check
          %p2370 = pneg %p288
        $region90: #{tpu_custom_call.1} parent=67 // pred_check_branch
          %2372 = sbr.rel (%p2370) target = $region92
        $region91: #{tpu_custom_call.1} parent=67 // pred_region
          %s2373 = sand.u32 %s273, 1
          %s2374 = scalar_lea.sflag [#allocation17], %s2373
          %s2375 = sand.u32 %s273, 1
          %s2376 = scalar_lea.vmem [#allocation16], %s2375
          %2377 = dma.done %s2374, 16
        $region92: #{tpu_custom_call.1} parent=67 // pred_fallthru
          _
      $region68: #{tpu_custom_call.1} parent=5 // pred_fallthru
        _
    $region6: #{tpu_custom_call.1} parent=1 // loop_footer
      %s31 = sadd.s32 1, %s27
    $region7: #{tpu_custom_call.1} parent=1 // loop_footer_branch
      %26 = sbr.rel target = $region3
    $region8: #{tpu_custom_call.1} parent=1 // loop_exit
      _
    %2378 = vsyncpa [#allocation9], 1
    %s2379 = scalar_lea.sflag [#allocation9], 1
    %2380 = vsyncpa %s2379, 1
    %2381 = vsyncpa [#allocation11], 1
    %s2382 = scalar_lea.sflag [#allocation11], 1
    %2383 = vsyncpa %s2382, 1
    %2384 = vsyncpa [#allocation14], 1
    %s2385 = scalar_lea.sflag [#allocation14], 1
    %2386 = vsyncpa %s2385, 1
    %2387 = vsyncpa [#allocation17], 1
    %s2388 = scalar_lea.sflag [#allocation17], 1
    %2389 = vsyncpa %s2388, 1

</llo_original>
